<compile_context>
chip_gen: v5e
topology: v5e:2x2
jax: 0.10.0
libtpu: 0.0.40
codegen_flags: <defaults>
</compile_context>

<pallas_src>
import jax
import jax.numpy as jnp
from jax import lax
from jax.experimental import pallas as pl
from jax.experimental.pallas import tpu as pltpu


H = W = 32                 # blight crop spatial size (Resize((32, 32)) in the spec)
C0, C1, C2 = 3, 16, 64     # conv channel widths; conv3 has Cout = 1


# --------------------------------------------------------------------------- kernel
def _blight_kernel(x_ref, weT_ref, beff_ref, wiT_ref, bg_ref, bhn_ref, o_ref):
    """TB crops per grid step: (folded conv1..3+flatten+fc) -> GRU(h0=0) -> ReLU."""
    E = bhn_ref.shape[-1]                                        # EMBEDDING_DIM

    # Folded conv stack + fc: one lane-dense K=3072 MXU matmul.
    # bf16 operands with f32 accumulation; everything downstream stays f32.
    xb = x_ref[...].astype(jnp.bfloat16)                         # (TB, 3072)
    x = jnp.dot(xb, weT_ref[...],
                preferred_element_type=jnp.float32) + beff_ref[...]   # (TB, BLIGHT) f32

    # Single GRU step with h0 == 0: h@W_hh terms vanish, b_hh{r,z} pre-folded into bg,
    # b_hh(n) kept separately because it is scaled by r.  Tiny matmul, kept in f32.
    g = jnp.dot(x, wiT_ref[...],
                preferred_element_type=jnp.float32) + bg_ref[...]     # (TB, 3E) f32
    r = jax.nn.sigmoid(g[:, 0:E])
    z = jax.nn.sigmoid(g[:, E:2 * E])
    n = jnp.tanh(g[:, 2 * E:3 * E] + r * bhn_ref[...])
    h = (1.0 - z) * n                                            # + z*h0, h0 == 0

    # ReLU; TODO(synk): nn.Dropout has no deterministic Pallas analogue — eval identity.
    o_ref[...] = jnp.maximum(h, 0.0)                             # (TB, E) f32


# --------------------------------------------------------------------------- wrapper
def blight_detector_forward(img_nchw, annots, packed):
    # TODO(synk): torch.load(YOLO) detection + per-box crop + Resize((32, 32)) are
    # data-dependent host-side ops with no Pallas equivalent; the input is assumed to
    # already be the (B, 3, 32, 32) blight crops.
    del annots
    B = img_nchw.shape[0]
    K = packed["weT"].shape[0]            # 3 * H * W
    BL = packed["weT"].shape[1]           # BLIGHT_DIM
    E = packed["bhn"].shape[-1]           # EMBEDDING_DIM

    # Free view: (B, 3, 32, 32) -> (B, 3072) in (c, h, w) row-major order, matching
    # the column order of the folded W_eff.  No im2col / transpose / cast in HBM.
    x = img_nchw.reshape(B, K)

    # Batch blocking: TB crops per grid step.  TB = full batch up to 128; for larger B
    # the grid has multiple steps ("parallel" -> v7x can use both TensorCores).
    TB = min(128, B)
    G = -(-B // TB)
    Bp = G * TB
    if Bp != B:                           # only possible when B > 128 and ragged
        x = jnp.pad(x, ((0, Bp - B), (0, 0)))

    order = ("weT", "beff", "wiT", "bg", "bhn")
    weights = [packed[k] for k in order]
    rep = lambda i: (0, 0)                # whole-array weight blocks, fetched once

    flops = 2 * Bp * K * BL + 2 * Bp * BL * 3 * E + 10 * Bp * E
    bytes_accessed = int(Bp * K * 4
                         + sum(int(w.size) * w.dtype.itemsize for w in weights)
                         + Bp * E * 4)
    cost = pl.CostEstimate(flops=flops, transcendentals=3 * Bp * E,
                           bytes_accessed=bytes_accessed)

    out = pl.pallas_call(
        _blight_kernel,
        out_shape=jax.ShapeDtypeStruct((Bp, E), jnp.float32),
        grid=(G,),
        in_specs=[pl.BlockSpec((TB, K), lambda i: (i, 0))]
                 + [pl.BlockSpec(w.shape, rep) for w in weights],
        out_specs=pl.BlockSpec((TB, E), lambda i: (i, 0)),
        compiler_params=pltpu.CompilerParams(dimension_semantics=("parallel",)),
        cost_estimate=cost,
    )(x, *weights)
    return out if Bp == B else out[:B]                           # (B, EMBEDDING_DIM)


# --------------------------------------------------------------------------- params
def init_params(key, blight_dim=32, emb_dim=32):
    """Parameters in genuine PyTorch layout (random init; Kaiming-uniform not reproduced)."""
    ks = jax.random.split(key, 12)

    def w(k, shape, fan_in):
        return jax.random.normal(k, shape, jnp.float32) * (1.0 / float(fan_in) ** 0.5)

    return {
        # Conv2d weights: PyTorch (Cout, Cin, kh, kw).
        "w1": w(ks[0], (C1, C0, 3, 3), 9 * C0), "b1": w(ks[1], (C1,), 9 * C0),
        "w2": w(ks[2], (C2, C1, 3, 3), 9 * C1), "b2": w(ks[3], (C2,), 9 * C1),
        "w3": w(ks[4], (1, C2, 3, 3), 9 * C2), "b3": w(ks[5], (1,), 9 * C2),
        # fc: Linear(1*32*32 -> BLIGHT_DIM), PyTorch (out, in) layout.
        "fc_w": w(ks[6], (blight_dim, H * W), H * W),
        "fc_b": w(ks[7], (blight_dim,), H * W),
        # GRU(input=BLIGHT_DIM, hidden=EMBEDDING_DIM), PyTorch layout, gate order (r,z,n).
        "gru_w_ih": w(ks[8], (3 * emb_dim, blight_dim), blight_dim),
        "gru_w_hh": w(ks[9], (3 * emb_dim, emb_dim), emb_dim),   # unused: h0 == 0
        "gru_b_ih": w(ks[10], (3 * emb_dim,), emb_dim),
        "gru_b_hh": w(ks[11], (3 * emb_dim,), emb_dim),
    }


def _conv_fc_affine(x_chw, p):
    """f32 reference affine map: crop (3,H,W) -> fc output (BLIGHT,).  Used only offline."""
    dn = ("NCHW", "OIHW", "NCHW")
    y = x_chw[None]
    y = lax.conv_general_dilated(y, p["w1"], (1, 1), "SAME",
                                 dimension_numbers=dn) + p["b1"][None, :, None, None]
    y = lax.conv_general_dilated(y, p["w2"], (1, 1), "SAME",
                                 dimension_numbers=dn) + p["b2"][None, :, None, None]
    y = lax.conv_general_dilated(y, p["w3"], (1, 1), "SAME",
                                 dimension_numbers=dn) + p["b3"][None, :, None, None]
    return (y.reshape(1, -1) @ p["fc_w"].T + p["fc_b"])[0]       # (BLIGHT,)


def pack_params(p):
    """One-time offline fold of the purely-affine conv1..3 + flatten + fc stack.

    W_eff / b_eff are computed exactly (f32) from the PyTorch-layout params via the
    Jacobian / zero-evaluation of the reference affine map; the GRU b_hh{r,z} biases
    are folded into the gate biases because h0 == 0.
    """
    f32, bf16 = jnp.float32, jnp.bfloat16
    zeros = jnp.zeros((C0, H, W), f32)
    b_eff = _conv_fc_affine(zeros, p)                                     # (BLIGHT,)
    W_eff = jax.jacrev(lambda x: _conv_fc_affine(x, p))(zeros)            # (BLIGHT,3,H,W)
    W_eff = W_eff.reshape(b_eff.shape[0], C0 * H * W)                     # (BLIGHT, 3072)

    e = p["gru_b_hh"].shape[0] // 3
    bg = jnp.concatenate([p["gru_b_ih"][0:2 * e] + p["gru_b_hh"][0:2 * e],
                          p["gru_b_ih"][2 * e:3 * e]])
    return {
        "weT": W_eff.T.astype(bf16),                    # (3072, BLIGHT) — the big matmul weight
        "beff": b_eff.reshape(1, -1).astype(f32),       # (1, BLIGHT)
        "wiT": p["gru_w_ih"].T.astype(f32),             # (BLIGHT, 3E), tiny, kept f32
        "bg": bg.reshape(1, -1).astype(f32),            # (1, 3E)
        "bhn": p["gru_b_hh"][2 * e:3 * e].reshape(1, -1).astype(f32),     # (1, E)
    }


# --------------------------------------------------------------------------- reference
def reference_forward(img, p):
    """Unfused all-f32 reference of the same forward semantics (for tolerance testing)."""
    dn = ("NCHW", "OIHW", "NCHW")
    y = lax.conv_general_dilated(img, p["w1"], (1, 1), "SAME",
                                 dimension_numbers=dn) + p["b1"][None, :, None, None]
    y = lax.conv_general_dilated(y, p["w2"], (1, 1), "SAME",
                                 dimension_numbers=dn) + p["b2"][None, :, None, None]
    y = lax.conv_general_dilated(y, p["w3"], (1, 1), "SAME",
                                 dimension_numbers=dn) + p["b3"][None, :, None, None]
    x = y.reshape(y.shape[0], -1) @ p["fc_w"].T + p["fc_b"]       # (B, BLIGHT)
    E = p["gru_b_hh"].shape[0] // 3
    gi = x @ p["gru_w_ih"].T + p["gru_b_ih"]
    r = jax.nn.sigmoid(gi[:, 0:E] + p["gru_b_hh"][0:E])
    z = jax.nn.sigmoid(gi[:, E:2 * E] + p["gru_b_hh"][E:2 * E])
    n = jnp.tanh(gi[:, 2 * E:3 * E] + r * p["gru_b_hh"][2 * E:3 * E])
    h = (1.0 - z) * n
    return jnp.maximum(h, 0.0)


# --------------------------------------------------------------------------- main
if __name__ == "__main__":
    B, BLIGHT_DIM, EMBEDDING_DIM = 2, 32, 32
    key = jax.random.PRNGKey(0)
    k_img, k_par = jax.random.split(key)

    # PyTorch-NCHW input, treated directly as the (B, 3, 32, 32) blight crops.
    img = jax.random.normal(k_img, (B, 3, 32, 32), jnp.float32)
    annots = jnp.zeros((B, 4), jnp.int32)    # placeholder boxes (unused, see TODO)
    params = init_params(k_par, BLIGHT_DIM, EMBEDDING_DIM)
    packed = pack_params(params)

    out = jax.jit(blight_detector_forward)(img, annots, packed)
    out = jax.block_until_ready(out)
    assert out.shape == (B, EMBEDDING_DIM) and out.dtype == jnp.float32

    # Tolerance check against the unfused all-f32 reference (bf16 matmul in the kernel).
    ref = jax.block_until_ready(jax.jit(reference_forward)(img, params))
    max_err = float(jnp.max(jnp.abs(out - ref)))
    assert max_err < 5e-2, f"kernel/reference mismatch: max |diff| = {max_err}"

    print("KERNEL_OK")
</pallas_src>

<mosaic_0001>
module attributes {stable_mosaic.version = 11 : i64} {
  func.func @_blight_kernel(%arg0: i32, %arg1: memref<2x3072xf32, #tpu.memory_space<vmem>>, %arg2: memref<3072x32xbf16, #tpu.memory_space<vmem>>, %arg3: memref<1x32xf32, #tpu.memory_space<vmem>>, %arg4: memref<32x96xf32, #tpu.memory_space<vmem>>, %arg5: memref<1x96xf32, #tpu.memory_space<vmem>>, %arg6: memref<1x32xf32, #tpu.memory_space<vmem>>, %arg7: memref<2x32xf32, #tpu.memory_space<vmem>>) attributes {dimension_semantics = [#tpu.dimension_semantics<parallel>], iteration_bounds = array<i64: 1>, scalar_prefetch = 0 : i64, scratch_operands = 0 : i64, tpu.core_type = #tpu.core_type<tc>, window_params = [{transform_indices = @transform_0, window_bounds = array<i64: 2, 3072>}, {pipeline_mode = #tpu.pipeline_mode<synchronous>, transform_indices = @transform_1, window_bounds = array<i64: 3072, 32>}, {pipeline_mode = #tpu.pipeline_mode<synchronous>, transform_indices = @transform_2, window_bounds = array<i64: 1, 32>}, {pipeline_mode = #tpu.pipeline_mode<synchronous>, transform_indices = @transform_3, window_bounds = array<i64: 32, 96>}, {pipeline_mode = #tpu.pipeline_mode<synchronous>, transform_indices = @transform_4, window_bounds = array<i64: 1, 96>}, {pipeline_mode = #tpu.pipeline_mode<synchronous>, transform_indices = @transform_5, window_bounds = array<i64: 1, 32>}, {transform_indices = @transform_6, window_bounds = array<i64: 2, 32>}]} {
    %c0 = arith.constant 0 : index
    %c0_0 = arith.constant 0 : index
    %0 = vector.load %arg1[%c0, %c0_0] : memref<2x3072xf32, #tpu.memory_space<vmem>>, vector<2x3072xf32>
    %1 = arith.truncf %0 : vector<2x3072xf32> to vector<2x3072xbf16>
    %c0_1 = arith.constant 0 : index
    %c0_2 = arith.constant 0 : index
    %2 = vector.load %arg2[%c0_1, %c0_2] : memref<3072x32xbf16, #tpu.memory_space<vmem>>, vector<3072x32xbf16>
    %cst = arith.constant dense<0.000000e+00> : vector<2x32xf32>
    %3 = tpu.matmul %1, %2, %cst {dimension_numbers = #tpu.dot_dimension_numbers<[1], [0], [0], [1], [0, 0, 1, 1], [], []>} : vector<2x3072xbf16>, vector<3072x32xbf16>, vector<2x32xf32> -> vector<2x32xf32>
    %c0_3 = arith.constant 0 : index
    %c0_4 = arith.constant 0 : index
    %4 = vector.load %arg3[%c0_3, %c0_4] : memref<1x32xf32, #tpu.memory_space<vmem>>, vector<1x32xf32>
    %5 = vector.broadcast %4 : vector<1x32xf32> to vector<2x32xf32>
    %6 = arith.addf %3, %5 : vector<2x32xf32>
    %c0_5 = arith.constant 0 : index
    %c0_6 = arith.constant 0 : index
    %7 = vector.load %arg4[%c0_5, %c0_6] : memref<32x96xf32, #tpu.memory_space<vmem>>, vector<32x96xf32>
    %cst_7 = arith.constant dense<0.000000e+00> : vector<2x96xf32>
    %8 = tpu.matmul %6, %7, %cst_7 {dimension_numbers = #tpu.dot_dimension_numbers<[1], [0], [0], [1], [0, 0, 1, 1], [], []>} : vector<2x32xf32>, vector<32x96xf32>, vector<2x96xf32> -> vector<2x96xf32>
    %c0_8 = arith.constant 0 : index
    %c0_9 = arith.constant 0 : index
    %9 = vector.load %arg5[%c0_8, %c0_9] : memref<1x96xf32, #tpu.memory_space<vmem>>, vector<1x96xf32>
    %10 = vector.broadcast %9 : vector<1x96xf32> to vector<2x96xf32>
    %11 = arith.addf %8, %10 : vector<2x96xf32>
    %12 = vector.extract_strided_slice %11 {offsets = [0, 0], sizes = [2, 32], strides = [1, 1]} : vector<2x96xf32> to vector<2x32xf32>
    %13 = arith.negf %12 : vector<2x32xf32>
    %14 = math.exp %13 : vector<2x32xf32>
    %cst_10 = arith.constant 1.000000e+00 : f32
    %15 = vector.broadcast %cst_10 : f32 to vector<2x32xf32>
    %16 = arith.addf %15, %14 : vector<2x32xf32>
    %17 = arith.divf %15, %16 : vector<2x32xf32>
    %18 = vector.extract_strided_slice %11 {offsets = [0, 32], sizes = [2, 32], strides = [1, 1]} : vector<2x96xf32> to vector<2x32xf32>
    %19 = arith.negf %18 : vector<2x32xf32>
    %20 = math.exp %19 : vector<2x32xf32>
    %cst_11 = arith.constant 1.000000e+00 : f32
    %21 = vector.broadcast %cst_11 : f32 to vector<2x32xf32>
    %22 = arith.addf %21, %20 : vector<2x32xf32>
    %23 = arith.divf %21, %22 : vector<2x32xf32>
    %24 = vector.extract_strided_slice %11 {offsets = [0, 64], sizes = [2, 32], strides = [1, 1]} : vector<2x96xf32> to vector<2x32xf32>
    %c0_12 = arith.constant 0 : index
    %c0_13 = arith.constant 0 : index
    %25 = vector.load %arg6[%c0_12, %c0_13] : memref<1x32xf32, #tpu.memory_space<vmem>>, vector<1x32xf32>
    %26 = vector.broadcast %25 : vector<1x32xf32> to vector<2x32xf32>
    %27 = arith.mulf %17, %26 : vector<2x32xf32>
    %28 = arith.addf %24, %27 : vector<2x32xf32>
    %29 = math.tanh %28 : vector<2x32xf32>
    %cst_14 = arith.constant 1.000000e+00 : f32
    %30 = vector.broadcast %cst_14 : f32 to vector<2x32xf32>
    %31 = arith.subf %30, %23 : vector<2x32xf32>
    %32 = arith.mulf %31, %29 : vector<2x32xf32>
    %cst_15 = arith.constant 0.000000e+00 : f32
    %33 = vector.broadcast %cst_15 : f32 to vector<2x32xf32>
    %34 = arith.maximumf %32, %33 : vector<2x32xf32>
    %c0_16 = arith.constant 0 : index
    %c0_17 = arith.constant 0 : index
    %35 = vector.load %arg7[%c0_16, %c0_17] : memref<2x32xf32, #tpu.memory_space<vmem>>, vector<2x32xf32>
    tpu.vector_store %arg7[%c0_16, %c0_17], %34 {strides = array<i32>} : memref<2x32xf32, #tpu.memory_space<vmem>>, vector<2x32xf32>,
    return
  }
  func.func @transform_0(%arg0: i32) -> (i32, i32) {
    %c0_i32 = arith.constant 0 : i32
    %c0_i32_0 = arith.constant 0 : i32
    return %arg0, %c0_i32 : i32, i32
  }
  func.func @transform_1(%arg0: i32) -> (i32, i32) {
    %c0_i32 = arith.constant 0 : i32
    %c0_i32_0 = arith.constant 0 : i32
    %c0_i32_1 = arith.constant 0 : i32
    return %c0_i32, %c0_i32_0 : i32, i32
  }
  func.func @transform_2(%arg0: i32) -> (i32, i32) {
    %c0_i32 = arith.constant 0 : i32
    %c0_i32_0 = arith.constant 0 : i32
    %c0_i32_1 = arith.constant 0 : i32
    return %c0_i32, %c0_i32_0 : i32, i32
  }
  func.func @transform_3(%arg0: i32) -> (i32, i32) {
    %c0_i32 = arith.constant 0 : i32
    %c0_i32_0 = arith.constant 0 : i32
    %c0_i32_1 = arith.constant 0 : i32
    return %c0_i32, %c0_i32_0 : i32, i32
  }
  func.func @transform_4(%arg0: i32) -> (i32, i32) {
    %c0_i32 = arith.constant 0 : i32
    %c0_i32_0 = arith.constant 0 : i32
    %c0_i32_1 = arith.constant 0 : i32
    return %c0_i32, %c0_i32_0 : i32, i32
  }
  func.func @transform_5(%arg0: i32) -> (i32, i32) {
    %c0_i32 = arith.constant 0 : i32
    %c0_i32_0 = arith.constant 0 : i32
    %c0_i32_1 = arith.constant 0 : i32
    return %c0_i32, %c0_i32_0 : i32, i32
  }
  func.func @transform_6(%arg0: i32) -> (i32, i32) {
    %c0_i32 = arith.constant 0 : i32
    %c0_i32_0 = arith.constant 0 : i32
    return %arg0, %c0_i32 : i32, i32
  }
}

</mosaic_0001>

<llo_original>
// kernel: blight_detector_forward.1
$region0: #{blight_detector_forward.1}
  #allocation0 [shape = 'u32[]', space=smem, size = 0x4, offset = 0x4, fixed_abs, tag = 'smem constant byte address 0x4 - core index']
  #allocation1 [shape = 'u32[72,128]{1,0:T(1,128)}', space=vmem, size = 0x9000, scoped, tag = 'internal scratch']
  %s0 = inlined_call_operand.vmem [shape: f32[2,3072], index: 0, kind: input, shape index: {}]
  %s1 = inlined_call_operand.vmem [shape: bf16[3072,32], index: 1, kind: input, shape index: {}]
  %s2 = inlined_call_operand.vmem [shape: f32[1,32], index: 2, kind: input, shape index: {}]
  %s3 = inlined_call_operand.vmem [shape: f32[32,96], index: 3, kind: input, shape index: {}]
  %s4 = inlined_call_operand.vmem [shape: f32[1,96], index: 4, kind: input, shape index: {}]
  %s5 = inlined_call_operand.vmem [shape: f32[1,32], index: 5, kind: input, shape index: {}]
  %s6 = inlined_call_operand.hbm [shape: f32[2,32], index: 6, kind: output, shape index: {}]
  %s7 = sld [smem:[#allocation0]]
  $region34: #{blight_detector_forward.1} parent=0
    _
  %s9 = ssub.s32 1, %s7
  %s10 = scalar_select 0, %s9, %s7
  $region1: #{blight_detector_forward.1} parent=0
    #allocation2 [shape = 'u8[1024]{0}', space=vmem, size = 0x400, scoped, tag = 'output window, operand 0, single buffered']
    #allocation3 [shape = 's32[1]{0}', space=sflag, size = 0x4, scoped, tag = 'scoped memory for blight_detector_forward.1']
    %11 = vsyncpa [#allocation3], 0
    // Predicated region
    $region2: #{blight_detector_forward.1} parent=1 // pred_check
      _
    $region3: #{blight_detector_forward.1} parent=1 // pred_check_branch
      %13 = sbr.rel (0) target = $region5
    $region4: #{blight_detector_forward.1} parent=1 // pred_region
      _
    $region5: #{blight_detector_forward.1} parent=1 // pred_fallthru
      _
    // Predicated region
    $region6: #{blight_detector_forward.1} parent=1 // pred_check
      _
    $region7: #{blight_detector_forward.1} parent=1 // pred_check_branch
      %15 = sbr.rel (0) target = $region9
    $region8: #{blight_detector_forward.1} parent=1 // pred_region
      _
    $region9: #{blight_detector_forward.1} parent=1 // pred_fallthru
      _
    // Predicated region
    $region10: #{blight_detector_forward.1} parent=1 // pred_check
      _
    $region11: #{blight_detector_forward.1} parent=1 // pred_check_branch
      %17 = sbr.rel (0) target = $region13
    $region12: #{blight_detector_forward.1} parent=1 // pred_region
      _
    $region13: #{blight_detector_forward.1} parent=1 // pred_fallthru
      _
    // Predicated region
    $region14: #{blight_detector_forward.1} parent=1 // pred_check
      _
    $region15: #{blight_detector_forward.1} parent=1 // pred_check_branch
      %19 = sbr.rel (0) target = $region17
    $region16: #{blight_detector_forward.1} parent=1 // pred_region
      _
    $region17: #{blight_detector_forward.1} parent=1 // pred_fallthru
      _
    // Predicated region
    $region18: #{blight_detector_forward.1} parent=1 // pred_check
      _
    $region19: #{blight_detector_forward.1} parent=1 // pred_check_branch
      %21 = sbr.rel (0) target = $region21
    $region20: #{blight_detector_forward.1} parent=1 // pred_region
      _
    $region21: #{blight_detector_forward.1} parent=1 // pred_fallthru
      _
    // Predicated region
    $region22: #{blight_detector_forward.1} parent=1 // pred_check
      _
    $region23: #{blight_detector_forward.1} parent=1 // pred_check_branch
      %23 = sbr.rel (0) target = $region25
    $region24: #{blight_detector_forward.1} parent=1 // pred_region
      _
    $region25: #{blight_detector_forward.1} parent=1 // pred_fallthru
      _
    %v24 = vld [vmem:[%s0] sm:$0xff]
    %v25 = vld [vmem:[%s0 + $0x8] sm:$0xff]
    %v26 = vld [vmem:[%s0 + $0x10] sm:$0xff]
    %v27 = vld [vmem:[%s0 + $0x18] sm:$0xff]
    %v28 = vld [vmem:[%s0 + $0x20] sm:$0xff]
    %v29 = vld [vmem:[%s0 + $0x28] sm:$0xff]
    %36 = vst [vmem:[#allocation1] ss:$4 sm:$0xff] %v24
    %s37 = scalar_lea.vmem [#allocation1], 32
    %38 = vst [vmem:[%s37] ss:$4 sm:$0xff] %v25
    %v39 = vld.sshfl [vmem:[#allocation1] sm:$0xff pattern:$0x73625140]
    %v40 = vld.sshfl [vmem:[#allocation1 + $0x8] sm:$0xff pattern:$0x73625140]
    %v41 = vld.sshfl [vmem:[#allocation1 + $0x10] sm:$0xff pattern:$0x73625140]
    %v42 = vld.sshfl [vmem:[#allocation1 + $0x18] sm:$0xff pattern:$0x73625140]
    %v43 = vld.sshfl [vmem:[#allocation1 + $0x20] sm:$0xff pattern:$0x73625140]
    %v44 = vld.sshfl [vmem:[#allocation1 + $0x28] sm:$0xff pattern:$0x73625140]
    %v45 = vld.sshfl [vmem:[#allocation1 + $0x30] sm:$0xff pattern:$0x73625140]
    %v46 = vld.sshfl [vmem:[#allocation1 + $0x38] sm:$0xff pattern:$0x73625140]
    %47 = vst [vmem:[#allocation1] ss:$4 sm:$0xff] %v26
    %48 = vst [vmem:[%s37] ss:$4 sm:$0xff] %v27
    %v49 = vld.sshfl [vmem:[#allocation1] sm:$0xff pattern:$0x73625140]
    %v50 = vld.sshfl [vmem:[#allocation1 + $0x8] sm:$0xff pattern:$0x73625140]
    %v51 = vld.sshfl [vmem:[#allocation1 + $0x10] sm:$0xff pattern:$0x73625140]
    %v52 = vld.sshfl [vmem:[#allocation1 + $0x18] sm:$0xff pattern:$0x73625140]
    %v53 = vld.sshfl [vmem:[#allocation1 + $0x20] sm:$0xff pattern:$0x73625140]
    %v54 = vld.sshfl [vmem:[#allocation1 + $0x28] sm:$0xff pattern:$0x73625140]
    %v55 = vld.sshfl [vmem:[#allocation1 + $0x30] sm:$0xff pattern:$0x73625140]
    %v56 = vld.sshfl [vmem:[#allocation1 + $0x38] sm:$0xff pattern:$0x73625140]
    %57 = vst [vmem:[#allocation1] ss:$4 sm:$0xff] %v28
    %58 = vst [vmem:[%s37] ss:$4 sm:$0xff] %v29
    %v59 = vld.sshfl [vmem:[#allocation1] sm:$0xff pattern:$0x73625140]
    %v60 = vld.sshfl [vmem:[#allocation1 + $0x8] sm:$0xff pattern:$0x73625140]
    %v61 = vld.sshfl [vmem:[#allocation1 + $0x10] sm:$0xff pattern:$0x73625140]
    %v62 = vld.sshfl [vmem:[#allocation1 + $0x18] sm:$0xff pattern:$0x73625140]
    %v63 = vld.sshfl [vmem:[#allocation1 + $0x20] sm:$0xff pattern:$0x73625140]
    %v64 = vld.sshfl [vmem:[#allocation1 + $0x28] sm:$0xff pattern:$0x73625140]
    %v65 = vld.sshfl [vmem:[#allocation1 + $0x30] sm:$0xff pattern:$0x73625140]
    %v66 = vld.sshfl [vmem:[#allocation1 + $0x38] sm:$0xff pattern:$0x73625140]
    %v91 = vpack.c.bf16 %v39, %v39
    %v92 = vpack.c.bf16 %v40, %v40
    %v93 = vpack.c.bf16 %v41, %v41
    %v94 = vpack.c.bf16 %v42, %v42
    %v95 = vpack.c.bf16 %v43, %v43
    %v96 = vpack.c.bf16 %v44, %v44
    %v97 = vpack.c.bf16 %v45, %v45
    %v98 = vpack.c.bf16 %v46, %v46
    %v99 = vpack.c.bf16 %v49, %v49
    %v100 = vpack.c.bf16 %v50, %v50
    %v101 = vpack.c.bf16 %v51, %v51
    %v102 = vpack.c.bf16 %v52, %v52
    %v103 = vpack.c.bf16 %v53, %v53
    %v104 = vpack.c.bf16 %v54, %v54
    %v105 = vpack.c.bf16 %v55, %v55
    %v106 = vpack.c.bf16 %v56, %v56
    %v107 = vpack.c.bf16 %v59, %v59
    %v108 = vpack.c.bf16 %v60, %v60
    %v109 = vpack.c.bf16 %v61, %v61
    %v110 = vpack.c.bf16 %v62, %v62
    %v111 = vpack.c.bf16 %v63, %v63
    %v112 = vpack.c.bf16 %v64, %v64
    %v113 = vpack.c.bf16 %v65, %v65
    %v114 = vpack.c.bf16 %v66, %v66
    %v115 = vld [vmem:[%s1] sm:$0xf]
    %v116 = vld [vmem:[%s1 + $0x4] sm:$0xf]
    %v117 = vld [vmem:[%s1 + $0x8] sm:$0xf]
    %v118 = vld [vmem:[%s1 + $0xc] sm:$0xf]
    %v119 = vld [vmem:[%s1 + $0x10] sm:$0xf]
    %v120 = vld [vmem:[%s1 + $0x14] sm:$0xf]
    %v121 = vld [vmem:[%s1 + $0x18] sm:$0xf]
    %v122 = vld [vmem:[%s1 + $0x1c] sm:$0xf]
    %v123 = vld [vmem:[%s1 + $0x20] sm:$0xf]
    %v124 = vld [vmem:[%s1 + $0x24] sm:$0xf]
    %v125 = vld [vmem:[%s1 + $0x28] sm:$0xf]
    %v126 = vld [vmem:[%s1 + $0x2c] sm:$0xf]
    %v127 = vld [vmem:[%s1 + $0x30] sm:$0xf]
    %v128 = vld [vmem:[%s1 + $0x34] sm:$0xf]
    %v129 = vld [vmem:[%s1 + $0x38] sm:$0xf]
    %v130 = vld [vmem:[%s1 + $0x3c] sm:$0xf]
    %v131 = vld [vmem:[%s1 + $0x40] sm:$0xf]
    %v132 = vld [vmem:[%s1 + $0x44] sm:$0xf]
    %v133 = vld [vmem:[%s1 + $0x48] sm:$0xf]
    %v134 = vld [vmem:[%s1 + $0x4c] sm:$0xf]
    %v135 = vld [vmem:[%s1 + $0x50] sm:$0xf]
    %v136 = vld [vmem:[%s1 + $0x54] sm:$0xf]
    %v137 = vld [vmem:[%s1 + $0x58] sm:$0xf]
    %v138 = vld [vmem:[%s1 + $0x5c] sm:$0xf]
    %v139 = vld [vmem:[%s1 + $0x60] sm:$0xf]
    %v140 = vld [vmem:[%s1 + $0x64] sm:$0xf]
    %v141 = vld [vmem:[%s1 + $0x68] sm:$0xf]
    %v142 = vld [vmem:[%s1 + $0x6c] sm:$0xf]
    %v143 = vld [vmem:[%s1 + $0x70] sm:$0xf]
    %v144 = vld [vmem:[%s1 + $0x74] sm:$0xf]
    %v145 = vld [vmem:[%s1 + $0x78] sm:$0xf]
    %v146 = vld [vmem:[%s1 + $0x7c] sm:$0xf]
    %v147 = vld [vmem:[%s1 + $0x80] sm:$0xf]
    %v148 = vld [vmem:[%s1 + $0x84] sm:$0xf]
    %v149 = vld [vmem:[%s1 + $0x88] sm:$0xf]
    %v150 = vld [vmem:[%s1 + $0x8c] sm:$0xf]
    %v151 = vld [vmem:[%s1 + $0x90] sm:$0xf]
    %v152 = vld [vmem:[%s1 + $0x94] sm:$0xf]
    %v153 = vld [vmem:[%s1 + $0x98] sm:$0xf]
    %v154 = vld [vmem:[%s1 + $0x9c] sm:$0xf]
    %v155 = vld [vmem:[%s1 + $0xa0] sm:$0xf]
    %v156 = vld [vmem:[%s1 + $0xa4] sm:$0xf]
    %v157 = vld [vmem:[%s1 + $0xa8] sm:$0xf]
    %v158 = vld [vmem:[%s1 + $0xac] sm:$0xf]
    %v159 = vld [vmem:[%s1 + $0xb0] sm:$0xf]
    %v160 = vld [vmem:[%s1 + $0xb4] sm:$0xf]
    %v161 = vld [vmem:[%s1 + $0xb8] sm:$0xf]
    %v162 = vld [vmem:[%s1 + $0xbc] sm:$0xf]
    %v163 = vld [vmem:[%s1 + $0xc0] sm:$0xf]
    %v164 = vld [vmem:[%s1 + $0xc4] sm:$0xf]
    %v165 = vld [vmem:[%s1 + $0xc8] sm:$0xf]
    %v166 = vld [vmem:[%s1 + $0xcc] sm:$0xf]
    %v167 = vld [vmem:[%s1 + $0xd0] sm:$0xf]
    %v168 = vld [vmem:[%s1 + $0xd4] sm:$0xf]
    %v169 = vld [vmem:[%s1 + $0xd8] sm:$0xf]
    %v170 = vld [vmem:[%s1 + $0xdc] sm:$0xf]
    %v171 = vld [vmem:[%s1 + $0xe0] sm:$0xf]
    %v172 = vld [vmem:[%s1 + $0xe4] sm:$0xf]
    %v173 = vld [vmem:[%s1 + $0xe8] sm:$0xf]
    %v174 = vld [vmem:[%s1 + $0xec] sm:$0xf]
    %v175 = vld [vmem:[%s1 + $0xf0] sm:$0xf]
    %v176 = vld [vmem:[%s1 + $0xf4] sm:$0xf]
    %v177 = vld [vmem:[%s1 + $0xf8] sm:$0xf]
    %v178 = vld [vmem:[%s1 + $0xfc] sm:$0xf]
    %v179 = vld [vmem:[%s1 + $0x100] sm:$0xf]
    %v180 = vld [vmem:[%s1 + $0x104] sm:$0xf]
    %v181 = vld [vmem:[%s1 + $0x108] sm:$0xf]
    %v182 = vld [vmem:[%s1 + $0x10c] sm:$0xf]
    %v183 = vld [vmem:[%s1 + $0x110] sm:$0xf]
    %v184 = vld [vmem:[%s1 + $0x114] sm:$0xf]
    %v185 = vld [vmem:[%s1 + $0x118] sm:$0xf]
    %v186 = vld [vmem:[%s1 + $0x11c] sm:$0xf]
    %v187 = vld [vmem:[%s1 + $0x120] sm:$0xf]
    %v188 = vld [vmem:[%s1 + $0x124] sm:$0xf]
    %v189 = vld [vmem:[%s1 + $0x128] sm:$0xf]
    %v190 = vld [vmem:[%s1 + $0x12c] sm:$0xf]
    %v191 = vld [vmem:[%s1 + $0x130] sm:$0xf]
    %v192 = vld [vmem:[%s1 + $0x134] sm:$0xf]
    %v193 = vld [vmem:[%s1 + $0x138] sm:$0xf]
    %v194 = vld [vmem:[%s1 + $0x13c] sm:$0xf]
    %v195 = vld [vmem:[%s1 + $0x140] sm:$0xf]
    %v196 = vld [vmem:[%s1 + $0x144] sm:$0xf]
    %v197 = vld [vmem:[%s1 + $0x148] sm:$0xf]
    %v198 = vld [vmem:[%s1 + $0x14c] sm:$0xf]
    %v199 = vld [vmem:[%s1 + $0x150] sm:$0xf]
    %v200 = vld [vmem:[%s1 + $0x154] sm:$0xf]
    %v201 = vld [vmem:[%s1 + $0x158] sm:$0xf]
    %v202 = vld [vmem:[%s1 + $0x15c] sm:$0xf]
    %v203 = vld [vmem:[%s1 + $0x160] sm:$0xf]
    %v204 = vld [vmem:[%s1 + $0x164] sm:$0xf]
    %v205 = vld [vmem:[%s1 + $0x168] sm:$0xf]
    %v206 = vld [vmem:[%s1 + $0x16c] sm:$0xf]
    %v207 = vld [vmem:[%s1 + $0x170] sm:$0xf]
    %v208 = vld [vmem:[%s1 + $0x174] sm:$0xf]
    %v209 = vld [vmem:[%s1 + $0x178] sm:$0xf]
    %v210 = vld [vmem:[%s1 + $0x17c] sm:$0xf]
    %v211 = vld [vmem:[%s1 + $0x180] sm:$0xf]
    %v212 = vld [vmem:[%s1 + $0x184] sm:$0xf]
    %v213 = vld [vmem:[%s1 + $0x188] sm:$0xf]
    %v214 = vld [vmem:[%s1 + $0x18c] sm:$0xf]
    %v215 = vld [vmem:[%s1 + $0x190] sm:$0xf]
    %v216 = vld [vmem:[%s1 + $0x194] sm:$0xf]
    %v217 = vld [vmem:[%s1 + $0x198] sm:$0xf]
    %v218 = vld [vmem:[%s1 + $0x19c] sm:$0xf]
    %v219 = vld [vmem:[%s1 + $0x1a0] sm:$0xf]
    %v220 = vld [vmem:[%s1 + $0x1a4] sm:$0xf]
    %v221 = vld [vmem:[%s1 + $0x1a8] sm:$0xf]
    %v222 = vld [vmem:[%s1 + $0x1ac] sm:$0xf]
    %v223 = vld [vmem:[%s1 + $0x1b0] sm:$0xf]
    %v224 = vld [vmem:[%s1 + $0x1b4] sm:$0xf]
    %v225 = vld [vmem:[%s1 + $0x1b8] sm:$0xf]
    %v226 = vld [vmem:[%s1 + $0x1bc] sm:$0xf]
    %v227 = vld [vmem:[%s1 + $0x1c0] sm:$0xf]
    %v228 = vld [vmem:[%s1 + $0x1c4] sm:$0xf]
    %v229 = vld [vmem:[%s1 + $0x1c8] sm:$0xf]
    %v230 = vld [vmem:[%s1 + $0x1cc] sm:$0xf]
    %v231 = vld [vmem:[%s1 + $0x1d0] sm:$0xf]
    %v232 = vld [vmem:[%s1 + $0x1d4] sm:$0xf]
    %v233 = vld [vmem:[%s1 + $0x1d8] sm:$0xf]
    %v234 = vld [vmem:[%s1 + $0x1dc] sm:$0xf]
    %v235 = vld [vmem:[%s1 + $0x1e0] sm:$0xf]
    %v236 = vld [vmem:[%s1 + $0x1e4] sm:$0xf]
    %v237 = vld [vmem:[%s1 + $0x1e8] sm:$0xf]
    %v238 = vld [vmem:[%s1 + $0x1ec] sm:$0xf]
    %v239 = vld [vmem:[%s1 + $0x1f0] sm:$0xf]
    %v240 = vld [vmem:[%s1 + $0x1f4] sm:$0xf]
    %v241 = vld [vmem:[%s1 + $0x1f8] sm:$0xf]
    %v242 = vld [vmem:[%s1 + $0x1fc] sm:$0xf]
    %v243 = vld [vmem:[%s1 + $0x200] sm:$0xf]
    %v244 = vld [vmem:[%s1 + $0x204] sm:$0xf]
    %v245 = vld [vmem:[%s1 + $0x208] sm:$0xf]
    %v246 = vld [vmem:[%s1 + $0x20c] sm:$0xf]
    %v247 = vld [vmem:[%s1 + $0x210] sm:$0xf]
    %v248 = vld [vmem:[%s1 + $0x214] sm:$0xf]
    %v249 = vld [vmem:[%s1 + $0x218] sm:$0xf]
    %v250 = vld [vmem:[%s1 + $0x21c] sm:$0xf]
    %v251 = vld [vmem:[%s1 + $0x220] sm:$0xf]
    %v252 = vld [vmem:[%s1 + $0x224] sm:$0xf]
    %v253 = vld [vmem:[%s1 + $0x228] sm:$0xf]
    %v254 = vld [vmem:[%s1 + $0x22c] sm:$0xf]
    %v255 = vld [vmem:[%s1 + $0x230] sm:$0xf]
    %v256 = vld [vmem:[%s1 + $0x234] sm:$0xf]
    %v257 = vld [vmem:[%s1 + $0x238] sm:$0xf]
    %v258 = vld [vmem:[%s1 + $0x23c] sm:$0xf]
    %v259 = vld [vmem:[%s1 + $0x240] sm:$0xf]
    %v260 = vld [vmem:[%s1 + $0x244] sm:$0xf]
    %v261 = vld [vmem:[%s1 + $0x248] sm:$0xf]
    %v262 = vld [vmem:[%s1 + $0x24c] sm:$0xf]
    %v263 = vld [vmem:[%s1 + $0x250] sm:$0xf]
    %v264 = vld [vmem:[%s1 + $0x254] sm:$0xf]
    %v265 = vld [vmem:[%s1 + $0x258] sm:$0xf]
    %v266 = vld [vmem:[%s1 + $0x25c] sm:$0xf]
    %v267 = vld [vmem:[%s1 + $0x260] sm:$0xf]
    %v268 = vld [vmem:[%s1 + $0x264] sm:$0xf]
    %v269 = vld [vmem:[%s1 + $0x268] sm:$0xf]
    %v270 = vld [vmem:[%s1 + $0x26c] sm:$0xf]
    %v271 = vld [vmem:[%s1 + $0x270] sm:$0xf]
    %v272 = vld [vmem:[%s1 + $0x274] sm:$0xf]
    %v273 = vld [vmem:[%s1 + $0x278] sm:$0xf]
    %v274 = vld [vmem:[%s1 + $0x27c] sm:$0xf]
    %v275 = vld [vmem:[%s1 + $0x280] sm:$0xf]
    %v276 = vld [vmem:[%s1 + $0x284] sm:$0xf]
    %v277 = vld [vmem:[%s1 + $0x288] sm:$0xf]
    %v278 = vld [vmem:[%s1 + $0x28c] sm:$0xf]
    %v279 = vld [vmem:[%s1 + $0x290] sm:$0xf]
    %v280 = vld [vmem:[%s1 + $0x294] sm:$0xf]
    %v281 = vld [vmem:[%s1 + $0x298] sm:$0xf]
    %v282 = vld [vmem:[%s1 + $0x29c] sm:$0xf]
    %v283 = vld [vmem:[%s1 + $0x2a0] sm:$0xf]
    %v284 = vld [vmem:[%s1 + $0x2a4] sm:$0xf]
    %v285 = vld [vmem:[%s1 + $0x2a8] sm:$0xf]
    %v286 = vld [vmem:[%s1 + $0x2ac] sm:$0xf]
    %v287 = vld [vmem:[%s1 + $0x2b0] sm:$0xf]
    %v288 = vld [vmem:[%s1 + $0x2b4] sm:$0xf]
    %v289 = vld [vmem:[%s1 + $0x2b8] sm:$0xf]
    %v290 = vld [vmem:[%s1 + $0x2bc] sm:$0xf]
    %v291 = vld [vmem:[%s1 + $0x2c0] sm:$0xf]
    %v292 = vld [vmem:[%s1 + $0x2c4] sm:$0xf]
    %v293 = vld [vmem:[%s1 + $0x2c8] sm:$0xf]
    %v294 = vld [vmem:[%s1 + $0x2cc] sm:$0xf]
    %v295 = vld [vmem:[%s1 + $0x2d0] sm:$0xf]
    %v296 = vld [vmem:[%s1 + $0x2d4] sm:$0xf]
    %v297 = vld [vmem:[%s1 + $0x2d8] sm:$0xf]
    %v298 = vld [vmem:[%s1 + $0x2dc] sm:$0xf]
    %v299 = vld [vmem:[%s1 + $0x2e0] sm:$0xf]
    %v300 = vld [vmem:[%s1 + $0x2e4] sm:$0xf]
    %v301 = vld [vmem:[%s1 + $0x2e8] sm:$0xf]
    %v302 = vld [vmem:[%s1 + $0x2ec] sm:$0xf]
    %v303 = vld [vmem:[%s1 + $0x2f0] sm:$0xf]
    %v304 = vld [vmem:[%s1 + $0x2f4] sm:$0xf]
    %v305 = vld [vmem:[%s1 + $0x2f8] sm:$0xf]
    %v306 = vld [vmem:[%s1 + $0x2fc] sm:$0xf]
    %v307 = vld [vmem:[%s1 + $0x300] sm:$0xf]
    %v308 = vld [vmem:[%s1 + $0x304] sm:$0xf]
    %v309 = vld [vmem:[%s1 + $0x308] sm:$0xf]
    %v310 = vld [vmem:[%s1 + $0x30c] sm:$0xf]
    %v311 = vld [vmem:[%s1 + $0x310] sm:$0xf]
    %v312 = vld [vmem:[%s1 + $0x314] sm:$0xf]
    %v313 = vld [vmem:[%s1 + $0x318] sm:$0xf]
    %v314 = vld [vmem:[%s1 + $0x31c] sm:$0xf]
    %v315 = vld [vmem:[%s1 + $0x320] sm:$0xf]
    %v316 = vld [vmem:[%s1 + $0x324] sm:$0xf]
    %v317 = vld [vmem:[%s1 + $0x328] sm:$0xf]
    %v318 = vld [vmem:[%s1 + $0x32c] sm:$0xf]
    %v319 = vld [vmem:[%s1 + $0x330] sm:$0xf]
    %v320 = vld [vmem:[%s1 + $0x334] sm:$0xf]
    %v321 = vld [vmem:[%s1 + $0x338] sm:$0xf]
    %v322 = vld [vmem:[%s1 + $0x33c] sm:$0xf]
    %v323 = vld [vmem:[%s1 + $0x340] sm:$0xf]
    %v324 = vld [vmem:[%s1 + $0x344] sm:$0xf]
    %v325 = vld [vmem:[%s1 + $0x348] sm:$0xf]
    %v326 = vld [vmem:[%s1 + $0x34c] sm:$0xf]
    %v327 = vld [vmem:[%s1 + $0x350] sm:$0xf]
    %v328 = vld [vmem:[%s1 + $0x354] sm:$0xf]
    %v329 = vld [vmem:[%s1 + $0x358] sm:$0xf]
    %v330 = vld [vmem:[%s1 + $0x35c] sm:$0xf]
    %v331 = vld [vmem:[%s1 + $0x360] sm:$0xf]
    %v332 = vld [vmem:[%s1 + $0x364] sm:$0xf]
    %v333 = vld [vmem:[%s1 + $0x368] sm:$0xf]
    %v334 = vld [vmem:[%s1 + $0x36c] sm:$0xf]
    %v335 = vld [vmem:[%s1 + $0x370] sm:$0xf]
    %v336 = vld [vmem:[%s1 + $0x374] sm:$0xf]
    %v337 = vld [vmem:[%s1 + $0x378] sm:$0xf]
    %v338 = vld [vmem:[%s1 + $0x37c] sm:$0xf]
    %v339 = vld [vmem:[%s1 + $0x380] sm:$0xf]
    %v340 = vld [vmem:[%s1 + $0x384] sm:$0xf]
    %v341 = vld [vmem:[%s1 + $0x388] sm:$0xf]
    %v342 = vld [vmem:[%s1 + $0x38c] sm:$0xf]
    %v343 = vld [vmem:[%s1 + $0x390] sm:$0xf]
    %v344 = vld [vmem:[%s1 + $0x394] sm:$0xf]
    %v345 = vld [vmem:[%s1 + $0x398] sm:$0xf]
    %v346 = vld [vmem:[%s1 + $0x39c] sm:$0xf]
    %v347 = vld [vmem:[%s1 + $0x3a0] sm:$0xf]
    %v348 = vld [vmem:[%s1 + $0x3a4] sm:$0xf]
    %v349 = vld [vmem:[%s1 + $0x3a8] sm:$0xf]
    %v350 = vld [vmem:[%s1 + $0x3ac] sm:$0xf]
    %v351 = vld [vmem:[%s1 + $0x3b0] sm:$0xf]
    %v352 = vld [vmem:[%s1 + $0x3b4] sm:$0xf]
    %v353 = vld [vmem:[%s1 + $0x3b8] sm:$0xf]
    %v354 = vld [vmem:[%s1 + $0x3bc] sm:$0xf]
    %v355 = vld [vmem:[%s1 + $0x3c0] sm:$0xf]
    %v356 = vld [vmem:[%s1 + $0x3c4] sm:$0xf]
    %v357 = vld [vmem:[%s1 + $0x3c8] sm:$0xf]
    %v358 = vld [vmem:[%s1 + $0x3cc] sm:$0xf]
    %v359 = vld [vmem:[%s1 + $0x3d0] sm:$0xf]
    %v360 = vld [vmem:[%s1 + $0x3d4] sm:$0xf]
    %v361 = vld [vmem:[%s1 + $0x3d8] sm:$0xf]
    %v362 = vld [vmem:[%s1 + $0x3dc] sm:$0xf]
    %v363 = vld [vmem:[%s1 + $0x3e0] sm:$0xf]
    %v364 = vld [vmem:[%s1 + $0x3e4] sm:$0xf]
    %v365 = vld [vmem:[%s1 + $0x3e8] sm:$0xf]
    %v366 = vld [vmem:[%s1 + $0x3ec] sm:$0xf]
    %v367 = vld [vmem:[%s1 + $0x3f0] sm:$0xf]
    %v368 = vld [vmem:[%s1 + $0x3f4] sm:$0xf]
    %v369 = vld [vmem:[%s1 + $0x3f8] sm:$0xf]
    %v370 = vld [vmem:[%s1 + $0x3fc] sm:$0xf]
    %v371 = vld [vmem:[%s1 + $0x400] sm:$0xf]
    %v372 = vld [vmem:[%s1 + $0x404] sm:$0xf]
    %v373 = vld [vmem:[%s1 + $0x408] sm:$0xf]
    %v374 = vld [vmem:[%s1 + $0x40c] sm:$0xf]
    %v375 = vld [vmem:[%s1 + $0x410] sm:$0xf]
    %v376 = vld [vmem:[%s1 + $0x414] sm:$0xf]
    %v377 = vld [vmem:[%s1 + $0x418] sm:$0xf]
    %v378 = vld [vmem:[%s1 + $0x41c] sm:$0xf]
    %v379 = vld [vmem:[%s1 + $0x420] sm:$0xf]
    %v380 = vld [vmem:[%s1 + $0x424] sm:$0xf]
    %v381 = vld [vmem:[%s1 + $0x428] sm:$0xf]
    %v382 = vld [vmem:[%s1 + $0x42c] sm:$0xf]
    %v383 = vld [vmem:[%s1 + $0x430] sm:$0xf]
    %v384 = vld [vmem:[%s1 + $0x434] sm:$0xf]
    %v385 = vld [vmem:[%s1 + $0x438] sm:$0xf]
    %v386 = vld [vmem:[%s1 + $0x43c] sm:$0xf]
    %v387 = vld [vmem:[%s1 + $0x440] sm:$0xf]
    %v388 = vld [vmem:[%s1 + $0x444] sm:$0xf]
    %v389 = vld [vmem:[%s1 + $0x448] sm:$0xf]
    %v390 = vld [vmem:[%s1 + $0x44c] sm:$0xf]
    %v391 = vld [vmem:[%s1 + $0x450] sm:$0xf]
    %v392 = vld [vmem:[%s1 + $0x454] sm:$0xf]
    %v393 = vld [vmem:[%s1 + $0x458] sm:$0xf]
    %v394 = vld [vmem:[%s1 + $0x45c] sm:$0xf]
    %v395 = vld [vmem:[%s1 + $0x460] sm:$0xf]
    %v396 = vld [vmem:[%s1 + $0x464] sm:$0xf]
    %v397 = vld [vmem:[%s1 + $0x468] sm:$0xf]
    %v398 = vld [vmem:[%s1 + $0x46c] sm:$0xf]
    %v399 = vld [vmem:[%s1 + $0x470] sm:$0xf]
    %v400 = vld [vmem:[%s1 + $0x474] sm:$0xf]
    %v401 = vld [vmem:[%s1 + $0x478] sm:$0xf]
    %v402 = vld [vmem:[%s1 + $0x47c] sm:$0xf]
    %v403 = vld [vmem:[%s1 + $0x480] sm:$0xf]
    %v404 = vld [vmem:[%s1 + $0x484] sm:$0xf]
    %v405 = vld [vmem:[%s1 + $0x488] sm:$0xf]
    %v406 = vld [vmem:[%s1 + $0x48c] sm:$0xf]
    %v407 = vld [vmem:[%s1 + $0x490] sm:$0xf]
    %v408 = vld [vmem:[%s1 + $0x494] sm:$0xf]
    %v409 = vld [vmem:[%s1 + $0x498] sm:$0xf]
    %v410 = vld [vmem:[%s1 + $0x49c] sm:$0xf]
    %v411 = vld [vmem:[%s1 + $0x4a0] sm:$0xf]
    %v412 = vld [vmem:[%s1 + $0x4a4] sm:$0xf]
    %v413 = vld [vmem:[%s1 + $0x4a8] sm:$0xf]
    %v414 = vld [vmem:[%s1 + $0x4ac] sm:$0xf]
    %v415 = vld [vmem:[%s1 + $0x4b0] sm:$0xf]
    %v416 = vld [vmem:[%s1 + $0x4b4] sm:$0xf]
    %v417 = vld [vmem:[%s1 + $0x4b8] sm:$0xf]
    %v418 = vld [vmem:[%s1 + $0x4bc] sm:$0xf]
    %v419 = vld [vmem:[%s1 + $0x4c0] sm:$0xf]
    %v420 = vld [vmem:[%s1 + $0x4c4] sm:$0xf]
    %v421 = vld [vmem:[%s1 + $0x4c8] sm:$0xf]
    %v422 = vld [vmem:[%s1 + $0x4cc] sm:$0xf]
    %v423 = vld [vmem:[%s1 + $0x4d0] sm:$0xf]
    %v424 = vld [vmem:[%s1 + $0x4d4] sm:$0xf]
    %v425 = vld [vmem:[%s1 + $0x4d8] sm:$0xf]
    %v426 = vld [vmem:[%s1 + $0x4dc] sm:$0xf]
    %v427 = vld [vmem:[%s1 + $0x4e0] sm:$0xf]
    %v428 = vld [vmem:[%s1 + $0x4e4] sm:$0xf]
    %v429 = vld [vmem:[%s1 + $0x4e8] sm:$0xf]
    %v430 = vld [vmem:[%s1 + $0x4ec] sm:$0xf]
    %v431 = vld [vmem:[%s1 + $0x4f0] sm:$0xf]
    %v432 = vld [vmem:[%s1 + $0x4f4] sm:$0xf]
    %v433 = vld [vmem:[%s1 + $0x4f8] sm:$0xf]
    %v434 = vld [vmem:[%s1 + $0x4fc] sm:$0xf]
    %v435 = vld [vmem:[%s1 + $0x500] sm:$0xf]
    %v436 = vld [vmem:[%s1 + $0x504] sm:$0xf]
    %v437 = vld [vmem:[%s1 + $0x508] sm:$0xf]
    %v438 = vld [vmem:[%s1 + $0x50c] sm:$0xf]
    %v439 = vld [vmem:[%s1 + $0x510] sm:$0xf]
    %v440 = vld [vmem:[%s1 + $0x514] sm:$0xf]
    %v441 = vld [vmem:[%s1 + $0x518] sm:$0xf]
    %v442 = vld [vmem:[%s1 + $0x51c] sm:$0xf]
    %v443 = vld [vmem:[%s1 + $0x520] sm:$0xf]
    %v444 = vld [vmem:[%s1 + $0x524] sm:$0xf]
    %v445 = vld [vmem:[%s1 + $0x528] sm:$0xf]
    %v446 = vld [vmem:[%s1 + $0x52c] sm:$0xf]
    %v447 = vld [vmem:[%s1 + $0x530] sm:$0xf]
    %v448 = vld [vmem:[%s1 + $0x534] sm:$0xf]
    %v449 = vld [vmem:[%s1 + $0x538] sm:$0xf]
    %v450 = vld [vmem:[%s1 + $0x53c] sm:$0xf]
    %v451 = vld [vmem:[%s1 + $0x540] sm:$0xf]
    %v452 = vld [vmem:[%s1 + $0x544] sm:$0xf]
    %v453 = vld [vmem:[%s1 + $0x548] sm:$0xf]
    %v454 = vld [vmem:[%s1 + $0x54c] sm:$0xf]
    %v455 = vld [vmem:[%s1 + $0x550] sm:$0xf]
    %v456 = vld [vmem:[%s1 + $0x554] sm:$0xf]
    %v457 = vld [vmem:[%s1 + $0x558] sm:$0xf]
    %v458 = vld [vmem:[%s1 + $0x55c] sm:$0xf]
    %v459 = vld [vmem:[%s1 + $0x560] sm:$0xf]
    %v460 = vld [vmem:[%s1 + $0x564] sm:$0xf]
    %v461 = vld [vmem:[%s1 + $0x568] sm:$0xf]
    %v462 = vld [vmem:[%s1 + $0x56c] sm:$0xf]
    %v463 = vld [vmem:[%s1 + $0x570] sm:$0xf]
    %v464 = vld [vmem:[%s1 + $0x574] sm:$0xf]
    %v465 = vld [vmem:[%s1 + $0x578] sm:$0xf]
    %v466 = vld [vmem:[%s1 + $0x57c] sm:$0xf]
    %v467 = vld [vmem:[%s1 + $0x580] sm:$0xf]
    %v468 = vld [vmem:[%s1 + $0x584] sm:$0xf]
    %v469 = vld [vmem:[%s1 + $0x588] sm:$0xf]
    %v470 = vld [vmem:[%s1 + $0x58c] sm:$0xf]
    %v471 = vld [vmem:[%s1 + $0x590] sm:$0xf]
    %v472 = vld [vmem:[%s1 + $0x594] sm:$0xf]
    %v473 = vld [vmem:[%s1 + $0x598] sm:$0xf]
    %v474 = vld [vmem:[%s1 + $0x59c] sm:$0xf]
    %v475 = vld [vmem:[%s1 + $0x5a0] sm:$0xf]
    %v476 = vld [vmem:[%s1 + $0x5a4] sm:$0xf]
    %v477 = vld [vmem:[%s1 + $0x5a8] sm:$0xf]
    %v478 = vld [vmem:[%s1 + $0x5ac] sm:$0xf]
    %v479 = vld [vmem:[%s1 + $0x5b0] sm:$0xf]
    %v480 = vld [vmem:[%s1 + $0x5b4] sm:$0xf]
    %v481 = vld [vmem:[%s1 + $0x5b8] sm:$0xf]
    %v482 = vld [vmem:[%s1 + $0x5bc] sm:$0xf]
    %v483 = vld [vmem:[%s1 + $0x5c0] sm:$0xf]
    %v484 = vld [vmem:[%s1 + $0x5c4] sm:$0xf]
    %v485 = vld [vmem:[%s1 + $0x5c8] sm:$0xf]
    %v486 = vld [vmem:[%s1 + $0x5cc] sm:$0xf]
    %v487 = vld [vmem:[%s1 + $0x5d0] sm:$0xf]
    %v488 = vld [vmem:[%s1 + $0x5d4] sm:$0xf]
    %v489 = vld [vmem:[%s1 + $0x5d8] sm:$0xf]
    %v490 = vld [vmem:[%s1 + $0x5dc] sm:$0xf]
    %v491 = vld [vmem:[%s1 + $0x5e0] sm:$0xf]
    %v492 = vld [vmem:[%s1 + $0x5e4] sm:$0xf]
    %v493 = vld [vmem:[%s1 + $0x5e8] sm:$0xf]
    %v494 = vld [vmem:[%s1 + $0x5ec] sm:$0xf]
    %v495 = vld [vmem:[%s1 + $0x5f0] sm:$0xf]
    %v496 = vld [vmem:[%s1 + $0x5f4] sm:$0xf]
    %v497 = vld [vmem:[%s1 + $0x5f8] sm:$0xf]
    %v498 = vld [vmem:[%s1 + $0x5fc] sm:$0xf]
    %v499 = vld [vmem:[%s2] sm:$0x1]
    %v501 = vperm.slane %v499, 0
    %v887 = vunpack.c.l.b16 %v115
    %v888 = vunpack.c.l.b16 %v116
    %v889 = vunpack.c.l.b16 %v117
    %v890 = vunpack.c.l.b16 %v118
    %v891 = vunpack.c.l.b16 %v119
    %v892 = vunpack.c.l.b16 %v120
    %v893 = vunpack.c.l.b16 %v121
    %v894 = vunpack.c.l.b16 %v122
    %v895 = vunpack.c.l.b16 %v123
    %v896 = vunpack.c.l.b16 %v124
    %v897 = vunpack.c.l.b16 %v125
    %v898 = vunpack.c.l.b16 %v126
    %v899 = vunpack.c.l.b16 %v127
    %v900 = vunpack.c.l.b16 %v128
    %v901 = vunpack.c.l.b16 %v129
    %v902 = vunpack.c.l.b16 %v130
    %v903 = vunpack.c.l.b16 %v131
    %v904 = vunpack.c.l.b16 %v132
    %v905 = vunpack.c.l.b16 %v133
    %v906 = vunpack.c.l.b16 %v134
    %v907 = vunpack.c.l.b16 %v135
    %v908 = vunpack.c.l.b16 %v136
    %v909 = vunpack.c.l.b16 %v137
    %v910 = vunpack.c.l.b16 %v138
    %v911 = vunpack.c.l.b16 %v139
    %v912 = vunpack.c.l.b16 %v140
    %v913 = vunpack.c.l.b16 %v141
    %v914 = vunpack.c.l.b16 %v142
    %v915 = vunpack.c.l.b16 %v143
    %v916 = vunpack.c.l.b16 %v144
    %v917 = vunpack.c.l.b16 %v145
    %v918 = vunpack.c.l.b16 %v146
    %v919 = vunpack.c.l.b16 %v147
    %v920 = vunpack.c.l.b16 %v148
    %v921 = vunpack.c.l.b16 %v149
    %v922 = vunpack.c.l.b16 %v150
    %v923 = vunpack.c.l.b16 %v151
    %v924 = vunpack.c.l.b16 %v152
    %v925 = vunpack.c.l.b16 %v153
    %v926 = vunpack.c.l.b16 %v154
    %v927 = vunpack.c.l.b16 %v155
    %v928 = vunpack.c.l.b16 %v156
    %v929 = vunpack.c.l.b16 %v157
    %v930 = vunpack.c.l.b16 %v158
    %v931 = vunpack.c.l.b16 %v159
    %v932 = vunpack.c.l.b16 %v160
    %v933 = vunpack.c.l.b16 %v161
    %v934 = vunpack.c.l.b16 %v162
    %v935 = vunpack.c.l.b16 %v163
    %v936 = vunpack.c.l.b16 %v164
    %v937 = vunpack.c.l.b16 %v165
    %v938 = vunpack.c.l.b16 %v166
    %v939 = vunpack.c.l.b16 %v167
    %v940 = vunpack.c.l.b16 %v168
    %v941 = vunpack.c.l.b16 %v169
    %v942 = vunpack.c.l.b16 %v170
    %v943 = vunpack.c.l.b16 %v171
    %v944 = vunpack.c.l.b16 %v172
    %v945 = vunpack.c.l.b16 %v173
    %v946 = vunpack.c.l.b16 %v174
    %v947 = vunpack.c.l.b16 %v175
    %v948 = vunpack.c.l.b16 %v176
    %v949 = vunpack.c.l.b16 %v177
    %v950 = vunpack.c.l.b16 %v178
    %v951 = vunpack.c.l.b16 %v179
    %v952 = vunpack.c.l.b16 %v180
    %v953 = vunpack.c.l.b16 %v181
    %v954 = vunpack.c.l.b16 %v182
    %v955 = vunpack.c.l.b16 %v183
    %v956 = vunpack.c.l.b16 %v184
    %v957 = vunpack.c.l.b16 %v185
    %v958 = vunpack.c.l.b16 %v186
    %v959 = vunpack.c.l.b16 %v187
    %v960 = vunpack.c.l.b16 %v188
    %v961 = vunpack.c.l.b16 %v189
    %v962 = vunpack.c.l.b16 %v190
    %v963 = vunpack.c.l.b16 %v191
    %v964 = vunpack.c.l.b16 %v192
    %v965 = vunpack.c.l.b16 %v193
    %v966 = vunpack.c.l.b16 %v194
    %v967 = vunpack.c.l.b16 %v195
    %v968 = vunpack.c.l.b16 %v196
    %v969 = vunpack.c.l.b16 %v197
    %v970 = vunpack.c.l.b16 %v198
    %v971 = vunpack.c.l.b16 %v199
    %v972 = vunpack.c.l.b16 %v200
    %v973 = vunpack.c.l.b16 %v201
    %v974 = vunpack.c.l.b16 %v202
    %v975 = vunpack.c.l.b16 %v203
    %v976 = vunpack.c.l.b16 %v204
    %v977 = vunpack.c.l.b16 %v205
    %v978 = vunpack.c.l.b16 %v206
    %v979 = vunpack.c.l.b16 %v207
    %v980 = vunpack.c.l.b16 %v208
    %v981 = vunpack.c.l.b16 %v209
    %v982 = vunpack.c.l.b16 %v210
    %v983 = vunpack.c.l.b16 %v211
    %v984 = vunpack.c.l.b16 %v212
    %v985 = vunpack.c.l.b16 %v213
    %v986 = vunpack.c.l.b16 %v214
    %v987 = vunpack.c.l.b16 %v215
    %v988 = vunpack.c.l.b16 %v216
    %v989 = vunpack.c.l.b16 %v217
    %v990 = vunpack.c.l.b16 %v218
    %v991 = vunpack.c.l.b16 %v219
    %v992 = vunpack.c.l.b16 %v220
    %v993 = vunpack.c.l.b16 %v221
    %v994 = vunpack.c.l.b16 %v222
    %v995 = vunpack.c.l.b16 %v223
    %v996 = vunpack.c.l.b16 %v224
    %v997 = vunpack.c.l.b16 %v225
    %v998 = vunpack.c.l.b16 %v226
    %v999 = vunpack.c.l.b16 %v227
    %v1000 = vunpack.c.l.b16 %v228
    %v1001 = vunpack.c.l.b16 %v229
    %v1002 = vunpack.c.l.b16 %v230
    %v1003 = vunpack.c.l.b16 %v231
    %v1004 = vunpack.c.l.b16 %v232
    %v1005 = vunpack.c.l.b16 %v233
    %v1006 = vunpack.c.l.b16 %v234
    %v1007 = vunpack.c.l.b16 %v235
    %v1008 = vunpack.c.l.b16 %v236
    %v1009 = vunpack.c.l.b16 %v237
    %v1010 = vunpack.c.l.b16 %v238
    %v1011 = vunpack.c.l.b16 %v239
    %v1012 = vunpack.c.l.b16 %v240
    %v1013 = vunpack.c.l.b16 %v241
    %v1014 = vunpack.c.l.b16 %v242
    %v1015 = vunpack.c.l.b16 %v243
    %v1016 = vunpack.c.l.b16 %v244
    %v1017 = vunpack.c.l.b16 %v245
    %v1018 = vunpack.c.l.b16 %v246
    %v1019 = vunpack.c.l.b16 %v247
    %v1020 = vunpack.c.l.b16 %v248
    %v1021 = vunpack.c.l.b16 %v249
    %v1022 = vunpack.c.l.b16 %v250
    %v1023 = vunpack.c.l.b16 %v251
    %v1024 = vunpack.c.l.b16 %v252
    %v1025 = vunpack.c.l.b16 %v253
    %v1026 = vunpack.c.l.b16 %v254
    %v1027 = vunpack.c.l.b16 %v255
    %v1028 = vunpack.c.l.b16 %v256
    %v1029 = vunpack.c.l.b16 %v257
    %v1030 = vunpack.c.l.b16 %v258
    %v1031 = vunpack.c.l.b16 %v259
    %v1032 = vunpack.c.l.b16 %v260
    %v1033 = vunpack.c.l.b16 %v261
    %v1034 = vunpack.c.l.b16 %v262
    %v1035 = vunpack.c.l.b16 %v263
    %v1036 = vunpack.c.l.b16 %v264
    %v1037 = vunpack.c.l.b16 %v265
    %v1038 = vunpack.c.l.b16 %v266
    %v1039 = vunpack.c.l.b16 %v267
    %v1040 = vunpack.c.l.b16 %v268
    %v1041 = vunpack.c.l.b16 %v269
    %v1042 = vunpack.c.l.b16 %v270
    %v1043 = vunpack.c.l.b16 %v271
    %v1044 = vunpack.c.l.b16 %v272
    %v1045 = vunpack.c.l.b16 %v273
    %v1046 = vunpack.c.l.b16 %v274
    %v1047 = vunpack.c.l.b16 %v275
    %v1048 = vunpack.c.l.b16 %v276
    %v1049 = vunpack.c.l.b16 %v277
    %v1050 = vunpack.c.l.b16 %v278
    %v1051 = vunpack.c.l.b16 %v279
    %v1052 = vunpack.c.l.b16 %v280
    %v1053 = vunpack.c.l.b16 %v281
    %v1054 = vunpack.c.l.b16 %v282
    %v1055 = vunpack.c.l.b16 %v283
    %v1056 = vunpack.c.l.b16 %v284
    %v1057 = vunpack.c.l.b16 %v285
    %v1058 = vunpack.c.l.b16 %v286
    %v1059 = vunpack.c.l.b16 %v287
    %v1060 = vunpack.c.l.b16 %v288
    %v1061 = vunpack.c.l.b16 %v289
    %v1062 = vunpack.c.l.b16 %v290
    %v1063 = vunpack.c.l.b16 %v291
    %v1064 = vunpack.c.l.b16 %v292
    %v1065 = vunpack.c.l.b16 %v293
    %v1066 = vunpack.c.l.b16 %v294
    %v1067 = vunpack.c.l.b16 %v295
    %v1068 = vunpack.c.l.b16 %v296
    %v1069 = vunpack.c.l.b16 %v297
    %v1070 = vunpack.c.l.b16 %v298
    %v1071 = vunpack.c.l.b16 %v299
    %v1072 = vunpack.c.l.b16 %v300
    %v1073 = vunpack.c.l.b16 %v301
    %v1074 = vunpack.c.l.b16 %v302
    %v1075 = vunpack.c.l.b16 %v303
    %v1076 = vunpack.c.l.b16 %v304
    %v1077 = vunpack.c.l.b16 %v305
    %v1078 = vunpack.c.l.b16 %v306
    %v1079 = vunpack.c.l.b16 %v307
    %v1080 = vunpack.c.l.b16 %v308
    %v1081 = vunpack.c.l.b16 %v309
    %v1082 = vunpack.c.l.b16 %v310
    %v1083 = vunpack.c.l.b16 %v311
    %v1084 = vunpack.c.l.b16 %v312
    %v1085 = vunpack.c.l.b16 %v313
    %v1086 = vunpack.c.l.b16 %v314
    %v1087 = vunpack.c.l.b16 %v315
    %v1088 = vunpack.c.l.b16 %v316
    %v1089 = vunpack.c.l.b16 %v317
    %v1090 = vunpack.c.l.b16 %v318
    %v1091 = vunpack.c.l.b16 %v319
    %v1092 = vunpack.c.l.b16 %v320
    %v1093 = vunpack.c.l.b16 %v321
    %v1094 = vunpack.c.l.b16 %v322
    %v1095 = vunpack.c.l.b16 %v323
    %v1096 = vunpack.c.l.b16 %v324
    %v1097 = vunpack.c.l.b16 %v325
    %v1098 = vunpack.c.l.b16 %v326
    %v1099 = vunpack.c.l.b16 %v327
    %v1100 = vunpack.c.l.b16 %v328
    %v1101 = vunpack.c.l.b16 %v329
    %v1102 = vunpack.c.l.b16 %v330
    %v1103 = vunpack.c.l.b16 %v331
    %v1104 = vunpack.c.l.b16 %v332
    %v1105 = vunpack.c.l.b16 %v333
    %v1106 = vunpack.c.l.b16 %v334
    %v1107 = vunpack.c.l.b16 %v335
    %v1108 = vunpack.c.l.b16 %v336
    %v1109 = vunpack.c.l.b16 %v337
    %v1110 = vunpack.c.l.b16 %v338
    %v1111 = vunpack.c.l.b16 %v339
    %v1112 = vunpack.c.l.b16 %v340
    %v1113 = vunpack.c.l.b16 %v341
    %v1114 = vunpack.c.l.b16 %v342
    %v1115 = vunpack.c.l.b16 %v343
    %v1116 = vunpack.c.l.b16 %v344
    %v1117 = vunpack.c.l.b16 %v345
    %v1118 = vunpack.c.l.b16 %v346
    %v1119 = vunpack.c.l.b16 %v347
    %v1120 = vunpack.c.l.b16 %v348
    %v1121 = vunpack.c.l.b16 %v349
    %v1122 = vunpack.c.l.b16 %v350
    %v1123 = vunpack.c.l.b16 %v351
    %v1124 = vunpack.c.l.b16 %v352
    %v1125 = vunpack.c.l.b16 %v353
    %v1126 = vunpack.c.l.b16 %v354
    %v1127 = vunpack.c.l.b16 %v355
    %v1128 = vunpack.c.l.b16 %v356
    %v1129 = vunpack.c.l.b16 %v357
    %v1130 = vunpack.c.l.b16 %v358
    %v1131 = vunpack.c.l.b16 %v359
    %v1132 = vunpack.c.l.b16 %v360
    %v1133 = vunpack.c.l.b16 %v361
    %v1134 = vunpack.c.l.b16 %v362
    %v1135 = vunpack.c.l.b16 %v363
    %v1136 = vunpack.c.l.b16 %v364
    %v1137 = vunpack.c.l.b16 %v365
    %v1138 = vunpack.c.l.b16 %v366
    %v1139 = vunpack.c.l.b16 %v367
    %v1140 = vunpack.c.l.b16 %v368
    %v1141 = vunpack.c.l.b16 %v369
    %v1142 = vunpack.c.l.b16 %v370
    %v1143 = vunpack.c.l.b16 %v371
    %v1144 = vunpack.c.l.b16 %v372
    %v1145 = vunpack.c.l.b16 %v373
    %v1146 = vunpack.c.l.b16 %v374
    %v1147 = vunpack.c.l.b16 %v375
    %v1148 = vunpack.c.l.b16 %v376
    %v1149 = vunpack.c.l.b16 %v377
    %v1150 = vunpack.c.l.b16 %v378
    %v1151 = vunpack.c.l.b16 %v379
    %v1152 = vunpack.c.l.b16 %v380
    %v1153 = vunpack.c.l.b16 %v381
    %v1154 = vunpack.c.l.b16 %v382
    %v1155 = vunpack.c.l.b16 %v383
    %v1156 = vunpack.c.l.b16 %v384
    %v1157 = vunpack.c.l.b16 %v385
    %v1158 = vunpack.c.l.b16 %v386
    %v1159 = vunpack.c.l.b16 %v387
    %v1160 = vunpack.c.l.b16 %v388
    %v1161 = vunpack.c.l.b16 %v389
    %v1162 = vunpack.c.l.b16 %v390
    %v1163 = vunpack.c.l.b16 %v391
    %v1164 = vunpack.c.l.b16 %v392
    %v1165 = vunpack.c.l.b16 %v393
    %v1166 = vunpack.c.l.b16 %v394
    %v1167 = vunpack.c.l.b16 %v395
    %v1168 = vunpack.c.l.b16 %v396
    %v1169 = vunpack.c.l.b16 %v397
    %v1170 = vunpack.c.l.b16 %v398
    %v1171 = vunpack.c.l.b16 %v399
    %v1172 = vunpack.c.l.b16 %v400
    %v1173 = vunpack.c.l.b16 %v401
    %v1174 = vunpack.c.l.b16 %v402
    %v1175 = vunpack.c.l.b16 %v403
    %v1176 = vunpack.c.l.b16 %v404
    %v1177 = vunpack.c.l.b16 %v405
    %v1178 = vunpack.c.l.b16 %v406
    %v1179 = vunpack.c.l.b16 %v407
    %v1180 = vunpack.c.l.b16 %v408
    %v1181 = vunpack.c.l.b16 %v409
    %v1182 = vunpack.c.l.b16 %v410
    %v1183 = vunpack.c.l.b16 %v411
    %v1184 = vunpack.c.l.b16 %v412
    %v1185 = vunpack.c.l.b16 %v413
    %v1186 = vunpack.c.l.b16 %v414
    %v1187 = vunpack.c.l.b16 %v415
    %v1188 = vunpack.c.l.b16 %v416
    %v1189 = vunpack.c.l.b16 %v417
    %v1190 = vunpack.c.l.b16 %v418
    %v1191 = vunpack.c.l.b16 %v419
    %v1192 = vunpack.c.l.b16 %v420
    %v1193 = vunpack.c.l.b16 %v421
    %v1194 = vunpack.c.l.b16 %v422
    %v1195 = vunpack.c.l.b16 %v423
    %v1196 = vunpack.c.l.b16 %v424
    %v1197 = vunpack.c.l.b16 %v425
    %v1198 = vunpack.c.l.b16 %v426
    %v1199 = vunpack.c.l.b16 %v427
    %v1200 = vunpack.c.l.b16 %v428
    %v1201 = vunpack.c.l.b16 %v429
    %v1202 = vunpack.c.l.b16 %v430
    %v1203 = vunpack.c.l.b16 %v431
    %v1204 = vunpack.c.l.b16 %v432
    %v1205 = vunpack.c.l.b16 %v433
    %v1206 = vunpack.c.l.b16 %v434
    %v1207 = vunpack.c.l.b16 %v435
    %v1208 = vunpack.c.l.b16 %v436
    %v1209 = vunpack.c.l.b16 %v437
    %v1210 = vunpack.c.l.b16 %v438
    %v1211 = vunpack.c.l.b16 %v439
    %v1212 = vunpack.c.l.b16 %v440
    %v1213 = vunpack.c.l.b16 %v441
    %v1214 = vunpack.c.l.b16 %v442
    %v1215 = vunpack.c.l.b16 %v443
    %v1216 = vunpack.c.l.b16 %v444
    %v1217 = vunpack.c.l.b16 %v445
    %v1218 = vunpack.c.l.b16 %v446
    %v1219 = vunpack.c.l.b16 %v447
    %v1220 = vunpack.c.l.b16 %v448
    %v1221 = vunpack.c.l.b16 %v449
    %v1222 = vunpack.c.l.b16 %v450
    %v1223 = vunpack.c.l.b16 %v451
    %v1224 = vunpack.c.l.b16 %v452
    %v1225 = vunpack.c.l.b16 %v453
    %v1226 = vunpack.c.l.b16 %v454
    %v1227 = vunpack.c.l.b16 %v455
    %v1228 = vunpack.c.l.b16 %v456
    %v1229 = vunpack.c.l.b16 %v457
    %v1230 = vunpack.c.l.b16 %v458
    %v1231 = vunpack.c.l.b16 %v459
    %v1232 = vunpack.c.l.b16 %v460
    %v1233 = vunpack.c.l.b16 %v461
    %v1234 = vunpack.c.l.b16 %v462
    %v1235 = vunpack.c.l.b16 %v463
    %v1236 = vunpack.c.l.b16 %v464
    %v1237 = vunpack.c.l.b16 %v465
    %v1238 = vunpack.c.l.b16 %v466
    %v1239 = vunpack.c.l.b16 %v467
    %v1240 = vunpack.c.l.b16 %v468
    %v1241 = vunpack.c.l.b16 %v469
    %v1242 = vunpack.c.l.b16 %v470
    %v1243 = vunpack.c.l.b16 %v471
    %v1244 = vunpack.c.l.b16 %v472
    %v1245 = vunpack.c.l.b16 %v473
    %v1246 = vunpack.c.l.b16 %v474
    %v1247 = vunpack.c.l.b16 %v475
    %v1248 = vunpack.c.l.b16 %v476
    %v1249 = vunpack.c.l.b16 %v477
    %v1250 = vunpack.c.l.b16 %v478
    %v1251 = vunpack.c.l.b16 %v479
    %v1252 = vunpack.c.l.b16 %v480
    %v1253 = vunpack.c.l.b16 %v481
    %v1254 = vunpack.c.l.b16 %v482
    %v1255 = vunpack.c.l.b16 %v483
    %v1256 = vunpack.c.l.b16 %v484
    %v1257 = vunpack.c.l.b16 %v485
    %v1258 = vunpack.c.l.b16 %v486
    %v1259 = vunpack.c.l.b16 %v487
    %v1260 = vunpack.c.l.b16 %v488
    %v1261 = vunpack.c.l.b16 %v489
    %v1262 = vunpack.c.l.b16 %v490
    %v1263 = vunpack.c.l.b16 %v491
    %v1264 = vunpack.c.l.b16 %v492
    %v1265 = vunpack.c.l.b16 %v493
    %v1266 = vunpack.c.l.b16 %v494
    %v1267 = vunpack.c.l.b16 %v495
    %v1268 = vunpack.c.l.b16 %v496
    %v1269 = vunpack.c.l.b16 %v497
    %v1270 = vunpack.c.l.b16 %v498
    %v1271 = vpack.c.b16 %v888, %v887
    %v1272 = vpack.c.b16 %v890, %v889
    %v1273 = vpack.c.b16 %v892, %v891
    %v1274 = vpack.c.b16 %v894, %v893
    %v1275 = vpack.c.b16 %v896, %v895
    %v1276 = vpack.c.b16 %v898, %v897
    %v1277 = vpack.c.b16 %v900, %v899
    %v1278 = vpack.c.b16 %v902, %v901
    %v1279 = vpack.c.b16 %v904, %v903
    %v1280 = vpack.c.b16 %v906, %v905
    %v1281 = vpack.c.b16 %v908, %v907
    %v1282 = vpack.c.b16 %v910, %v909
    %v1283 = vpack.c.b16 %v912, %v911
    %v1284 = vpack.c.b16 %v914, %v913
    %v1285 = vpack.c.b16 %v916, %v915
    %v1286 = vpack.c.b16 %v918, %v917
    %v1287 = vpack.c.b16 %v920, %v919
    %v1288 = vpack.c.b16 %v922, %v921
    %v1289 = vpack.c.b16 %v924, %v923
    %v1290 = vpack.c.b16 %v926, %v925
    %v1291 = vpack.c.b16 %v928, %v927
    %v1292 = vpack.c.b16 %v930, %v929
    %v1293 = vpack.c.b16 %v932, %v931
    %v1294 = vpack.c.b16 %v934, %v933
    %v1295 = vpack.c.b16 %v936, %v935
    %v1296 = vpack.c.b16 %v938, %v937
    %v1297 = vpack.c.b16 %v940, %v939
    %v1298 = vpack.c.b16 %v942, %v941
    %v1299 = vpack.c.b16 %v944, %v943
    %v1300 = vpack.c.b16 %v946, %v945
    %v1301 = vpack.c.b16 %v948, %v947
    %v1302 = vpack.c.b16 %v950, %v949
    %v1303 = vpack.c.b16 %v952, %v951
    %v1304 = vpack.c.b16 %v954, %v953
    %v1305 = vpack.c.b16 %v956, %v955
    %v1306 = vpack.c.b16 %v958, %v957
    %v1307 = vpack.c.b16 %v960, %v959
    %v1308 = vpack.c.b16 %v962, %v961
    %v1309 = vpack.c.b16 %v964, %v963
    %v1310 = vpack.c.b16 %v966, %v965
    %v1311 = vpack.c.b16 %v968, %v967
    %v1312 = vpack.c.b16 %v970, %v969
    %v1313 = vpack.c.b16 %v972, %v971
    %v1314 = vpack.c.b16 %v974, %v973
    %v1315 = vpack.c.b16 %v976, %v975
    %v1316 = vpack.c.b16 %v978, %v977
    %v1317 = vpack.c.b16 %v980, %v979
    %v1318 = vpack.c.b16 %v982, %v981
    %v1319 = vpack.c.b16 %v984, %v983
    %v1320 = vpack.c.b16 %v986, %v985
    %v1321 = vpack.c.b16 %v988, %v987
    %v1322 = vpack.c.b16 %v990, %v989
    %v1323 = vpack.c.b16 %v992, %v991
    %v1324 = vpack.c.b16 %v994, %v993
    %v1325 = vpack.c.b16 %v996, %v995
    %v1326 = vpack.c.b16 %v998, %v997
    %v1327 = vpack.c.b16 %v1000, %v999
    %v1328 = vpack.c.b16 %v1002, %v1001
    %v1329 = vpack.c.b16 %v1004, %v1003
    %v1330 = vpack.c.b16 %v1006, %v1005
    %v1331 = vpack.c.b16 %v1008, %v1007
    %v1332 = vpack.c.b16 %v1010, %v1009
    %v1333 = vpack.c.b16 %v1012, %v1011
    %v1334 = vpack.c.b16 %v1014, %v1013
    %v1335 = vpack.c.b16 %v1016, %v1015
    %v1336 = vpack.c.b16 %v1018, %v1017
    %v1337 = vpack.c.b16 %v1020, %v1019
    %v1338 = vpack.c.b16 %v1022, %v1021
    %v1339 = vpack.c.b16 %v1024, %v1023
    %v1340 = vpack.c.b16 %v1026, %v1025
    %v1341 = vpack.c.b16 %v1028, %v1027
    %v1342 = vpack.c.b16 %v1030, %v1029
    %v1343 = vpack.c.b16 %v1032, %v1031
    %v1344 = vpack.c.b16 %v1034, %v1033
    %v1345 = vpack.c.b16 %v1036, %v1035
    %v1346 = vpack.c.b16 %v1038, %v1037
    %v1347 = vpack.c.b16 %v1040, %v1039
    %v1348 = vpack.c.b16 %v1042, %v1041
    %v1349 = vpack.c.b16 %v1044, %v1043
    %v1350 = vpack.c.b16 %v1046, %v1045
    %v1351 = vpack.c.b16 %v1048, %v1047
    %v1352 = vpack.c.b16 %v1050, %v1049
    %v1353 = vpack.c.b16 %v1052, %v1051
    %v1354 = vpack.c.b16 %v1054, %v1053
    %v1355 = vpack.c.b16 %v1056, %v1055
    %v1356 = vpack.c.b16 %v1058, %v1057
    %v1357 = vpack.c.b16 %v1060, %v1059
    %v1358 = vpack.c.b16 %v1062, %v1061
    %v1359 = vpack.c.b16 %v1064, %v1063
    %v1360 = vpack.c.b16 %v1066, %v1065
    %v1361 = vpack.c.b16 %v1068, %v1067
    %v1362 = vpack.c.b16 %v1070, %v1069
    %v1363 = vpack.c.b16 %v1072, %v1071
    %v1364 = vpack.c.b16 %v1074, %v1073
    %v1365 = vpack.c.b16 %v1076, %v1075
    %v1366 = vpack.c.b16 %v1078, %v1077
    %v1367 = vpack.c.b16 %v1080, %v1079
    %v1368 = vpack.c.b16 %v1082, %v1081
    %v1369 = vpack.c.b16 %v1084, %v1083
    %v1370 = vpack.c.b16 %v1086, %v1085
    %v1371 = vpack.c.b16 %v1088, %v1087
    %v1372 = vpack.c.b16 %v1090, %v1089
    %v1373 = vpack.c.b16 %v1092, %v1091
    %v1374 = vpack.c.b16 %v1094, %v1093
    %v1375 = vpack.c.b16 %v1096, %v1095
    %v1376 = vpack.c.b16 %v1098, %v1097
    %v1377 = vpack.c.b16 %v1100, %v1099
    %v1378 = vpack.c.b16 %v1102, %v1101
    %v1379 = vpack.c.b16 %v1104, %v1103
    %v1380 = vpack.c.b16 %v1106, %v1105
    %v1381 = vpack.c.b16 %v1108, %v1107
    %v1382 = vpack.c.b16 %v1110, %v1109
    %v1383 = vpack.c.b16 %v1112, %v1111
    %v1384 = vpack.c.b16 %v1114, %v1113
    %v1385 = vpack.c.b16 %v1116, %v1115
    %v1386 = vpack.c.b16 %v1118, %v1117
    %v1387 = vpack.c.b16 %v1120, %v1119
    %v1388 = vpack.c.b16 %v1122, %v1121
    %v1389 = vpack.c.b16 %v1124, %v1123
    %v1390 = vpack.c.b16 %v1126, %v1125
    %v1391 = vpack.c.b16 %v1128, %v1127
    %v1392 = vpack.c.b16 %v1130, %v1129
    %v1393 = vpack.c.b16 %v1132, %v1131
    %v1394 = vpack.c.b16 %v1134, %v1133
    %v1395 = vpack.c.b16 %v1136, %v1135
    %v1396 = vpack.c.b16 %v1138, %v1137
    %v1397 = vpack.c.b16 %v1140, %v1139
    %v1398 = vpack.c.b16 %v1142, %v1141
    %v1399 = vpack.c.b16 %v1144, %v1143
    %v1400 = vpack.c.b16 %v1146, %v1145
    %v1401 = vpack.c.b16 %v1148, %v1147
    %v1402 = vpack.c.b16 %v1150, %v1149
    %v1403 = vpack.c.b16 %v1152, %v1151
    %v1404 = vpack.c.b16 %v1154, %v1153
    %v1405 = vpack.c.b16 %v1156, %v1155
    %v1406 = vpack.c.b16 %v1158, %v1157
    %v1407 = vpack.c.b16 %v1160, %v1159
    %v1408 = vpack.c.b16 %v1162, %v1161
    %v1409 = vpack.c.b16 %v1164, %v1163
    %v1410 = vpack.c.b16 %v1166, %v1165
    %v1411 = vpack.c.b16 %v1168, %v1167
    %v1412 = vpack.c.b16 %v1170, %v1169
    %v1413 = vpack.c.b16 %v1172, %v1171
    %v1414 = vpack.c.b16 %v1174, %v1173
    %v1415 = vpack.c.b16 %v1176, %v1175
    %v1416 = vpack.c.b16 %v1178, %v1177
    %v1417 = vpack.c.b16 %v1180, %v1179
    %v1418 = vpack.c.b16 %v1182, %v1181
    %v1419 = vpack.c.b16 %v1184, %v1183
    %v1420 = vpack.c.b16 %v1186, %v1185
    %v1421 = vpack.c.b16 %v1188, %v1187
    %v1422 = vpack.c.b16 %v1190, %v1189
    %v1423 = vpack.c.b16 %v1192, %v1191
    %v1424 = vpack.c.b16 %v1194, %v1193
    %v1425 = vpack.c.b16 %v1196, %v1195
    %v1426 = vpack.c.b16 %v1198, %v1197
    %v1427 = vpack.c.b16 %v1200, %v1199
    %v1428 = vpack.c.b16 %v1202, %v1201
    %v1429 = vpack.c.b16 %v1204, %v1203
    %v1430 = vpack.c.b16 %v1206, %v1205
    %v1431 = vpack.c.b16 %v1208, %v1207
    %v1432 = vpack.c.b16 %v1210, %v1209
    %v1433 = vpack.c.b16 %v1212, %v1211
    %v1434 = vpack.c.b16 %v1214, %v1213
    %v1435 = vpack.c.b16 %v1216, %v1215
    %v1436 = vpack.c.b16 %v1218, %v1217
    %v1437 = vpack.c.b16 %v1220, %v1219
    %v1438 = vpack.c.b16 %v1222, %v1221
    %v1439 = vpack.c.b16 %v1224, %v1223
    %v1440 = vpack.c.b16 %v1226, %v1225
    %v1441 = vpack.c.b16 %v1228, %v1227
    %v1442 = vpack.c.b16 %v1230, %v1229
    %v1443 = vpack.c.b16 %v1232, %v1231
    %v1444 = vpack.c.b16 %v1234, %v1233
    %v1445 = vpack.c.b16 %v1236, %v1235
    %v1446 = vpack.c.b16 %v1238, %v1237
    %v1447 = vpack.c.b16 %v1240, %v1239
    %v1448 = vpack.c.b16 %v1242, %v1241
    %v1449 = vpack.c.b16 %v1244, %v1243
    %v1450 = vpack.c.b16 %v1246, %v1245
    %v1451 = vpack.c.b16 %v1248, %v1247
    %v1452 = vpack.c.b16 %v1250, %v1249
    %v1453 = vpack.c.b16 %v1252, %v1251
    %v1454 = vpack.c.b16 %v1254, %v1253
    %v1455 = vpack.c.b16 %v1256, %v1255
    %v1456 = vpack.c.b16 %v1258, %v1257
    %v1457 = vpack.c.b16 %v1260, %v1259
    %v1458 = vpack.c.b16 %v1262, %v1261
    %v1459 = vpack.c.b16 %v1264, %v1263
    %v1460 = vpack.c.b16 %v1266, %v1265
    %v1461 = vpack.c.b16 %v1268, %v1267
    %v1462 = vpack.c.b16 %v1270, %v1269
    %1655 = vmatpush.bf16.msra.mxu0 %v1278
    %1656 = vmatpush.bf16.msra.mxu0 %v1277
    %1657 = vmatpush.bf16.msra.mxu0 %v1276
    %1658 = vmatpush.bf16.msra.mxu0 %v1275
    %1659 = vmatpush.bf16.msra.mxu0 %v1274
    %1660 = vmatpush.bf16.msra.mxu0 %v1273
    %1661 = vmatpush.bf16.msra.mxu0 %v1272
    %1662 = vmatpush.bf16.msra.mxu0 %v1271
    %1663 = vmatmul.bf16.gmra.mxu0 %v91
    %v1664 = vpop.f32.mrf.mxu0
    %v1665 = vadd.f32 %v501, %v1664
    %v1666 = vpop.f32.mrf.mxu0
    %1667 = vdwg.mxu0
    %1668 = vmatpush.bf16.msra.mxu0 %v1286
    %1669 = vmatpush.bf16.msra.mxu0 %v1285
    %1670 = vmatpush.bf16.msra.mxu0 %v1284
    %1671 = vmatpush.bf16.msra.mxu0 %v1283
    %1672 = vmatpush.bf16.msra.mxu0 %v1282
    %1673 = vmatpush.bf16.msra.mxu0 %v1281
    %1674 = vmatpush.bf16.msra.mxu0 %v1280
    %1675 = vmatpush.bf16.msra.mxu0 %v1279
    %1676 = vmatmul.bf16.gmra.mxu0 %v92
    %v1677 = vpop.f32.mrf.mxu0
    %v1678 = vadd.f32 %v1665, %v1677
    %v1679 = vpop.f32.mrf.mxu0
    %1680 = vdwg.mxu0
    %1681 = vmatpush.bf16.msra.mxu0 %v1294
    %1682 = vmatpush.bf16.msra.mxu0 %v1293
    %1683 = vmatpush.bf16.msra.mxu0 %v1292
    %1684 = vmatpush.bf16.msra.mxu0 %v1291
    %1685 = vmatpush.bf16.msra.mxu0 %v1290
    %1686 = vmatpush.bf16.msra.mxu0 %v1289
    %1687 = vmatpush.bf16.msra.mxu0 %v1288
    %1688 = vmatpush.bf16.msra.mxu0 %v1287
    %1689 = vmatmul.bf16.gmra.mxu0 %v93
    %v1690 = vpop.f32.mrf.mxu0
    %v1691 = vadd.f32 %v1678, %v1690
    %v1692 = vpop.f32.mrf.mxu0
    %1693 = vdwg.mxu0
    %1694 = vmatpush.bf16.msra.mxu0 %v1302
    %1695 = vmatpush.bf16.msra.mxu0 %v1301
    %1696 = vmatpush.bf16.msra.mxu0 %v1300
    %1697 = vmatpush.bf16.msra.mxu0 %v1299
    %1698 = vmatpush.bf16.msra.mxu0 %v1298
    %1699 = vmatpush.bf16.msra.mxu0 %v1297
    %1700 = vmatpush.bf16.msra.mxu0 %v1296
    %1701 = vmatpush.bf16.msra.mxu0 %v1295
    %1702 = vmatmul.bf16.gmra.mxu0 %v94
    %v1703 = vpop.f32.mrf.mxu0
    %v1704 = vadd.f32 %v1691, %v1703
    %v1705 = vpop.f32.mrf.mxu0
    %1706 = vdwg.mxu0
    %1707 = vmatpush.bf16.msra.mxu0 %v1310
    %1708 = vmatpush.bf16.msra.mxu0 %v1309
    %1709 = vmatpush.bf16.msra.mxu0 %v1308
    %1710 = vmatpush.bf16.msra.mxu0 %v1307
    %1711 = vmatpush.bf16.msra.mxu0 %v1306
    %1712 = vmatpush.bf16.msra.mxu0 %v1305
    %1713 = vmatpush.bf16.msra.mxu0 %v1304
    %1714 = vmatpush.bf16.msra.mxu0 %v1303
    %1715 = vmatmul.bf16.gmra.mxu0 %v95
    %v1716 = vpop.f32.mrf.mxu0
    %v1717 = vadd.f32 %v1704, %v1716
    %v1718 = vpop.f32.mrf.mxu0
    %1719 = vdwg.mxu0
    %1720 = vmatpush.bf16.msra.mxu0 %v1318
    %1721 = vmatpush.bf16.msra.mxu0 %v1317
    %1722 = vmatpush.bf16.msra.mxu0 %v1316
    %1723 = vmatpush.bf16.msra.mxu0 %v1315
    %1724 = vmatpush.bf16.msra.mxu0 %v1314
    %1725 = vmatpush.bf16.msra.mxu0 %v1313
    %1726 = vmatpush.bf16.msra.mxu0 %v1312
    %1727 = vmatpush.bf16.msra.mxu0 %v1311
    %1728 = vmatmul.bf16.gmra.mxu0 %v96
    %v1729 = vpop.f32.mrf.mxu0
    %v1730 = vadd.f32 %v1717, %v1729
    %v1731 = vpop.f32.mrf.mxu0
    %1732 = vdwg.mxu0
    %1733 = vmatpush.bf16.msra.mxu0 %v1326
    %1734 = vmatpush.bf16.msra.mxu0 %v1325
    %1735 = vmatpush.bf16.msra.mxu0 %v1324
    %1736 = vmatpush.bf16.msra.mxu0 %v1323
    %1737 = vmatpush.bf16.msra.mxu0 %v1322
    %1738 = vmatpush.bf16.msra.mxu0 %v1321
    %1739 = vmatpush.bf16.msra.mxu0 %v1320
    %1740 = vmatpush.bf16.msra.mxu0 %v1319
    %1741 = vmatmul.bf16.gmra.mxu0 %v97
    %v1742 = vpop.f32.mrf.mxu0
    %v1743 = vadd.f32 %v1730, %v1742
    %v1744 = vpop.f32.mrf.mxu0
    %1745 = vdwg.mxu0
    %1746 = vmatpush.bf16.msra.mxu0 %v1334
    %1747 = vmatpush.bf16.msra.mxu0 %v1333
    %1748 = vmatpush.bf16.msra.mxu0 %v1332
    %1749 = vmatpush.bf16.msra.mxu0 %v1331
    %1750 = vmatpush.bf16.msra.mxu0 %v1330
    %1751 = vmatpush.bf16.msra.mxu0 %v1329
    %1752 = vmatpush.bf16.msra.mxu0 %v1328
    %1753 = vmatpush.bf16.msra.mxu0 %v1327
    %1754 = vmatmul.bf16.gmra.mxu0 %v98
    %v1755 = vpop.f32.mrf.mxu0
    %v1756 = vadd.f32 %v1743, %v1755
    %v1757 = vpop.f32.mrf.mxu0
    %1758 = vdwg.mxu0
    %1759 = vmatpush.bf16.msra.mxu0 %v1342
    %1760 = vmatpush.bf16.msra.mxu0 %v1341
    %1761 = vmatpush.bf16.msra.mxu0 %v1340
    %1762 = vmatpush.bf16.msra.mxu0 %v1339
    %1763 = vmatpush.bf16.msra.mxu0 %v1338
    %1764 = vmatpush.bf16.msra.mxu0 %v1337
    %1765 = vmatpush.bf16.msra.mxu0 %v1336
    %1766 = vmatpush.bf16.msra.mxu0 %v1335
    %1767 = vmatmul.bf16.gmra.mxu0 %v99
    %v1768 = vpop.f32.mrf.mxu0
    %v1769 = vadd.f32 %v1756, %v1768
    %v1770 = vpop.f32.mrf.mxu0
    %1771 = vdwg.mxu0
    %1772 = vmatpush.bf16.msra.mxu0 %v1350
    %1773 = vmatpush.bf16.msra.mxu0 %v1349
    %1774 = vmatpush.bf16.msra.mxu0 %v1348
    %1775 = vmatpush.bf16.msra.mxu0 %v1347
    %1776 = vmatpush.bf16.msra.mxu0 %v1346
    %1777 = vmatpush.bf16.msra.mxu0 %v1345
    %1778 = vmatpush.bf16.msra.mxu0 %v1344
    %1779 = vmatpush.bf16.msra.mxu0 %v1343
    %1780 = vmatmul.bf16.gmra.mxu0 %v100
    %v1781 = vpop.f32.mrf.mxu0
    %v1782 = vadd.f32 %v1769, %v1781
    %v1783 = vpop.f32.mrf.mxu0
    %1784 = vdwg.mxu0
    %1785 = vmatpush.bf16.msra.mxu0 %v1358
    %1786 = vmatpush.bf16.msra.mxu0 %v1357
    %1787 = vmatpush.bf16.msra.mxu0 %v1356
    %1788 = vmatpush.bf16.msra.mxu0 %v1355
    %1789 = vmatpush.bf16.msra.mxu0 %v1354
    %1790 = vmatpush.bf16.msra.mxu0 %v1353
    %1791 = vmatpush.bf16.msra.mxu0 %v1352
    %1792 = vmatpush.bf16.msra.mxu0 %v1351
    %1793 = vmatmul.bf16.gmra.mxu0 %v101
    %v1794 = vpop.f32.mrf.mxu0
    %v1795 = vadd.f32 %v1782, %v1794
    %v1796 = vpop.f32.mrf.mxu0
    %1797 = vdwg.mxu0
    %1798 = vmatpush.bf16.msra.mxu0 %v1366
    %1799 = vmatpush.bf16.msra.mxu0 %v1365
    %1800 = vmatpush.bf16.msra.mxu0 %v1364
    %1801 = vmatpush.bf16.msra.mxu0 %v1363
    %1802 = vmatpush.bf16.msra.mxu0 %v1362
    %1803 = vmatpush.bf16.msra.mxu0 %v1361
    %1804 = vmatpush.bf16.msra.mxu0 %v1360
    %1805 = vmatpush.bf16.msra.mxu0 %v1359
    %1806 = vmatmul.bf16.gmra.mxu0 %v102
    %v1807 = vpop.f32.mrf.mxu0
    %v1808 = vadd.f32 %v1795, %v1807
    %v1809 = vpop.f32.mrf.mxu0
    %1810 = vdwg.mxu0
    %1811 = vmatpush.bf16.msra.mxu0 %v1374
    %1812 = vmatpush.bf16.msra.mxu0 %v1373
    %1813 = vmatpush.bf16.msra.mxu0 %v1372
    %1814 = vmatpush.bf16.msra.mxu0 %v1371
    %1815 = vmatpush.bf16.msra.mxu0 %v1370
    %1816 = vmatpush.bf16.msra.mxu0 %v1369
    %1817 = vmatpush.bf16.msra.mxu0 %v1368
    %1818 = vmatpush.bf16.msra.mxu0 %v1367
    %1819 = vmatmul.bf16.gmra.mxu0 %v103
    %v1820 = vpop.f32.mrf.mxu0
    %v1821 = vadd.f32 %v1808, %v1820
    %v1822 = vpop.f32.mrf.mxu0
    %1823 = vdwg.mxu0
    %1824 = vmatpush.bf16.msra.mxu0 %v1382
    %1825 = vmatpush.bf16.msra.mxu0 %v1381
    %1826 = vmatpush.bf16.msra.mxu0 %v1380
    %1827 = vmatpush.bf16.msra.mxu0 %v1379
    %1828 = vmatpush.bf16.msra.mxu0 %v1378
    %1829 = vmatpush.bf16.msra.mxu0 %v1377
    %1830 = vmatpush.bf16.msra.mxu0 %v1376
    %1831 = vmatpush.bf16.msra.mxu0 %v1375
    %1832 = vmatmul.bf16.gmra.mxu0 %v104
    %v1833 = vpop.f32.mrf.mxu0
    %v1834 = vadd.f32 %v1821, %v1833
    %v1835 = vpop.f32.mrf.mxu0
    %1836 = vdwg.mxu0
    %1837 = vmatpush.bf16.msra.mxu0 %v1390
    %1838 = vmatpush.bf16.msra.mxu0 %v1389
    %1839 = vmatpush.bf16.msra.mxu0 %v1388
    %1840 = vmatpush.bf16.msra.mxu0 %v1387
    %1841 = vmatpush.bf16.msra.mxu0 %v1386
    %1842 = vmatpush.bf16.msra.mxu0 %v1385
    %1843 = vmatpush.bf16.msra.mxu0 %v1384
    %1844 = vmatpush.bf16.msra.mxu0 %v1383
    %1845 = vmatmul.bf16.gmra.mxu0 %v105
    %v1846 = vpop.f32.mrf.mxu0
    %v1847 = vadd.f32 %v1834, %v1846
    %v1848 = vpop.f32.mrf.mxu0
    %1849 = vdwg.mxu0
    %1850 = vmatpush.bf16.msra.mxu0 %v1398
    %1851 = vmatpush.bf16.msra.mxu0 %v1397
    %1852 = vmatpush.bf16.msra.mxu0 %v1396
    %1853 = vmatpush.bf16.msra.mxu0 %v1395
    %1854 = vmatpush.bf16.msra.mxu0 %v1394
    %1855 = vmatpush.bf16.msra.mxu0 %v1393
    %1856 = vmatpush.bf16.msra.mxu0 %v1392
    %1857 = vmatpush.bf16.msra.mxu0 %v1391
    %1858 = vmatmul.bf16.gmra.mxu0 %v106
    %v1859 = vpop.f32.mrf.mxu0
    %v1860 = vadd.f32 %v1847, %v1859
    %v1861 = vpop.f32.mrf.mxu0
    %1862 = vdwg.mxu0
    %1863 = vmatpush.bf16.msra.mxu0 %v1406
    %1864 = vmatpush.bf16.msra.mxu0 %v1405
    %1865 = vmatpush.bf16.msra.mxu0 %v1404
    %1866 = vmatpush.bf16.msra.mxu0 %v1403
    %1867 = vmatpush.bf16.msra.mxu0 %v1402
    %1868 = vmatpush.bf16.msra.mxu0 %v1401
    %1869 = vmatpush.bf16.msra.mxu0 %v1400
    %1870 = vmatpush.bf16.msra.mxu0 %v1399
    %1871 = vmatmul.bf16.gmra.mxu0 %v107
    %v1872 = vpop.f32.mrf.mxu0
    %v1873 = vadd.f32 %v1860, %v1872
    %v1874 = vpop.f32.mrf.mxu0
    %1875 = vdwg.mxu0
    %1876 = vmatpush.bf16.msra.mxu0 %v1414
    %1877 = vmatpush.bf16.msra.mxu0 %v1413
    %1878 = vmatpush.bf16.msra.mxu0 %v1412
    %1879 = vmatpush.bf16.msra.mxu0 %v1411
    %1880 = vmatpush.bf16.msra.mxu0 %v1410
    %1881 = vmatpush.bf16.msra.mxu0 %v1409
    %1882 = vmatpush.bf16.msra.mxu0 %v1408
    %1883 = vmatpush.bf16.msra.mxu0 %v1407
    %1884 = vmatmul.bf16.gmra.mxu0 %v108
    %v1885 = vpop.f32.mrf.mxu0
    %v1886 = vadd.f32 %v1873, %v1885
    %v1887 = vpop.f32.mrf.mxu0
    %1888 = vdwg.mxu0
    %1889 = vmatpush.bf16.msra.mxu0 %v1422
    %1890 = vmatpush.bf16.msra.mxu0 %v1421
    %1891 = vmatpush.bf16.msra.mxu0 %v1420
    %1892 = vmatpush.bf16.msra.mxu0 %v1419
    %1893 = vmatpush.bf16.msra.mxu0 %v1418
    %1894 = vmatpush.bf16.msra.mxu0 %v1417
    %1895 = vmatpush.bf16.msra.mxu0 %v1416
    %1896 = vmatpush.bf16.msra.mxu0 %v1415
    %1897 = vmatmul.bf16.gmra.mxu0 %v109
    %v1898 = vpop.f32.mrf.mxu0
    %v1899 = vadd.f32 %v1886, %v1898
    %v1900 = vpop.f32.mrf.mxu0
    %1901 = vdwg.mxu0
    %1902 = vmatpush.bf16.msra.mxu0 %v1430
    %1903 = vmatpush.bf16.msra.mxu0 %v1429
    %1904 = vmatpush.bf16.msra.mxu0 %v1428
    %1905 = vmatpush.bf16.msra.mxu0 %v1427
    %1906 = vmatpush.bf16.msra.mxu0 %v1426
    %1907 = vmatpush.bf16.msra.mxu0 %v1425
    %1908 = vmatpush.bf16.msra.mxu0 %v1424
    %1909 = vmatpush.bf16.msra.mxu0 %v1423
    %1910 = vmatmul.bf16.gmra.mxu0 %v110
    %v1911 = vpop.f32.mrf.mxu0
    %v1912 = vadd.f32 %v1899, %v1911
    %v1913 = vpop.f32.mrf.mxu0
    %1914 = vdwg.mxu0
    %1915 = vmatpush.bf16.msra.mxu0 %v1438
    %1916 = vmatpush.bf16.msra.mxu0 %v1437
    %1917 = vmatpush.bf16.msra.mxu0 %v1436
    %1918 = vmatpush.bf16.msra.mxu0 %v1435
    %1919 = vmatpush.bf16.msra.mxu0 %v1434
    %1920 = vmatpush.bf16.msra.mxu0 %v1433
    %1921 = vmatpush.bf16.msra.mxu0 %v1432
    %1922 = vmatpush.bf16.msra.mxu0 %v1431
    %1923 = vmatmul.bf16.gmra.mxu0 %v111
    %v1924 = vpop.f32.mrf.mxu0
    %v1925 = vadd.f32 %v1912, %v1924
    %v1926 = vpop.f32.mrf.mxu0
    %1927 = vdwg.mxu0
    %1928 = vmatpush.bf16.msra.mxu0 %v1446
    %1929 = vmatpush.bf16.msra.mxu0 %v1445
    %1930 = vmatpush.bf16.msra.mxu0 %v1444
    %1931 = vmatpush.bf16.msra.mxu0 %v1443
    %1932 = vmatpush.bf16.msra.mxu0 %v1442
    %1933 = vmatpush.bf16.msra.mxu0 %v1441
    %1934 = vmatpush.bf16.msra.mxu0 %v1440
    %1935 = vmatpush.bf16.msra.mxu0 %v1439
    %1936 = vmatmul.bf16.gmra.mxu0 %v112
    %v1937 = vpop.f32.mrf.mxu0
    %v1938 = vadd.f32 %v1925, %v1937
    %v1939 = vpop.f32.mrf.mxu0
    %1940 = vdwg.mxu0
    %1941 = vmatpush.bf16.msra.mxu0 %v1454
    %1942 = vmatpush.bf16.msra.mxu0 %v1453
    %1943 = vmatpush.bf16.msra.mxu0 %v1452
    %1944 = vmatpush.bf16.msra.mxu0 %v1451
    %1945 = vmatpush.bf16.msra.mxu0 %v1450
    %1946 = vmatpush.bf16.msra.mxu0 %v1449
    %1947 = vmatpush.bf16.msra.mxu0 %v1448
    %1948 = vmatpush.bf16.msra.mxu0 %v1447
    %1949 = vmatmul.bf16.gmra.mxu0 %v113
    %v1950 = vpop.f32.mrf.mxu0
    %v1951 = vadd.f32 %v1938, %v1950
    %v1952 = vpop.f32.mrf.mxu0
    %1953 = vdwg.mxu0
    %1954 = vmatpush.bf16.msra.mxu0 %v1462
    %1955 = vmatpush.bf16.msra.mxu0 %v1461
    %1956 = vmatpush.bf16.msra.mxu0 %v1460
    %1957 = vmatpush.bf16.msra.mxu0 %v1459
    %1958 = vmatpush.bf16.msra.mxu0 %v1458
    %1959 = vmatpush.bf16.msra.mxu0 %v1457
    %1960 = vmatpush.bf16.msra.mxu0 %v1456
    %1961 = vmatpush.bf16.msra.mxu0 %v1455
    %1962 = vmatmul.bf16.gmra.mxu0 %v114
    %v1963 = vpop.f32.mrf.mxu0
    %v1964 = vadd.f32 %v1951, %v1963
    %v1965 = vpop.f32.mrf.mxu0
    %1966 = vdwg.mxu0
    %v1967 = vld [vmem:[%s3] sm:$0xff]
    %v1968 = vld [vmem:[%s3 + $0x8] sm:$0xff]
    %v1969 = vld [vmem:[%s3 + $0x10] sm:$0xff]
    %v1970 = vld [vmem:[%s3 + $0x18] sm:$0xff]
    %v1971 = vld [vmem:[%s4] sm:$0x1]
    %v1973 = vperm.slane %v1971, 0
    %vm1975 = vcmask 261120
    %v1977 = vsel %vm1975, %v1964, 0
    %1979 = vmatpush.msra.mxu0 0.0
    %1980 = vmatpush.msra.mxu0 0.0
    %1981 = vmatpush.msra.mxu0 0.0
    %1982 = vmatpush.msra.mxu0 0.0
    %1983 = vmatpush.msra.mxu0 0.0
    %1984 = vmatpush.msra.mxu0 0.0
    %1985 = vmatpush.msra.mxu0 0.0
    %1986 = vmatpush.msra.mxu0 0.0
    %1987 = vmatpush.msra.mxu0 0.0
    %1988 = vmatpush.msra.mxu0 0.0
    %1989 = vmatpush.msra.mxu0 0.0
    %1990 = vmatpush.msra.mxu0 0.0
    %1991 = vmatpush.msra.mxu0 %v1970
    %1992 = vmatpush.msra.mxu0 %v1969
    %1993 = vmatpush.msra.mxu0 %v1968
    %1994 = vmatpush.msra.mxu0 %v1967
    %1995 = vmatmul.f32.gmra.mxu0 %v1977
    %v1996 = vpop.f32.mrf.mxu0
    %v1997 = vadd.f32 %v1973, %v1996
    %1998 = vdwg.mxu0
    %v1999 = vxor.u32 %v1997, 2147483648
    %v2000 = vmul.f32 %v1999, 1.442695
    %v2001 = vpow.pop %v2000
    %v2002 = vadd.f32 %v2001, 1.0
    %v2003 = vrcp.pop %v2002
    %v2004 = vmul.f32 %v2002, %v2003
    %v2005 = vsub.f32 1.0, %v2004
    %v2006 = vmul.f32 %v2003, %v2005
    %v2007 = vadd.f32 %v2003, %v2006
    %vm2008 = vweird.f32 %v2002
    %vm2009 = vweird.f32 %v2003
    %vm2010 = vmor %vm2008, %vm2009
    %v2011 = vsel %vm2010, %v2003, %v2007
    %v2012 = vand.u32 2147483647, %v2002
    %vm2013 = vcmp.eq.f32.partialorder %v2012, 8.507059e+37
    %v2014 = vand.u32 %v2002, 2147483648
    %v2015 = vor.u32 1.1754944e-38, %v2014
    %v2016 = vsel %vm2013, %v2015, %v2011
    %v2017 = vmul.f32 1.0, %v2016
    %v2018 = vld [vmem:[%s5] sm:$0x1]
    %v2020 = vperm.slane %v2018, 0
    %v2022 = vmul.f32 %v2017, %v2020
    %2024 = vrot.lane.b32.xlu0 %v2022, 64
    %v2025 = vpop.permute.xlu0 %2024
    %v2027 = vadd.f32 %v1997, %v2025
    %v2028 = vtanh.pop %v2027
    %v2029 = vsub.f32 1.0, %v2017
    %2031 = vrot.lane.b32.xlu0 %v2028, 96
    %v2032 = vpop.permute.xlu0 %2031
    %v2034 = vmul.f32 %v2029, %v2032
    %v2035 = vmax.f32 %v2034, 0.0
    %2037 = vrot.lane.b32.xlu0 %v2035, 96
    %v2038 = vpop.permute.xlu0 %2037
    %vm2040 = vcmask 254976
    %2041 = vst.msk [vmem:[#allocation2] sm:$0x3] %vm2040, %v2038
    // Predicated region
    $region26: #{blight_detector_forward.1} parent=1 // pred_check
      _
    $region27: #{blight_detector_forward.1} parent=1 // pred_check_branch
      %2043 = sbr.rel (0) target = $region29
    $region28: #{blight_detector_forward.1} parent=1 // pred_region
      %2045 = vsyncadd [#allocation3], 0
      %s2047 = sshll.u32 [#allocation2], 4
      %s2048 = int_to_ptr.vmem [resolvable:$true] %s2047
      %s2049 = sshll.u32 %s6, 4
      %s2050 = int_to_ptr.hbm [resolvable:$true] %s2049
      %2052 = dma.vmem_to_hbm [thread:$0]  %s2048, 32, %s2050, [#allocation3]
    $region29: #{blight_detector_forward.1} parent=1 // pred_fallthru
      _
    // Predicated region
    $region30: #{blight_detector_forward.1} parent=1 // pred_check
      _
    $region31: #{blight_detector_forward.1} parent=1 // pred_check_branch
      %2054 = sbr.rel (0) target = $region33
    $region32: #{blight_detector_forward.1} parent=1 // pred_region
      %2056 = dma.done [#allocation3], 32
    $region33: #{blight_detector_forward.1} parent=1 // pred_fallthru
      _
    %2057 = vsyncpa [#allocation3], 1

</llo_original>
